<compile_context>
chip_gen: v7x
topology: tpu7x:2x2x1
jax: 0.10.0
libtpu: 0.0.40
codegen_flags: <defaults>
</compile_context>

<pallas_src>
import functools

import jax
import jax.numpy as jnp
from jax.experimental import pallas as pl
from jax.experimental.pallas import tpu as pltpu


def _dense_layer_kernel(x_ref, s1_ref, b1_ref, w1t_ref, s2_ref, b2_ref,
                        w2t_ref, mask_ref, o_ref, *, W, Cin, G):
    """Fused BN1+ReLU -> 1x1 conv -> BN2+ReLU -> 3x3 conv -> channel concat.

    x_ref   : (1, Cin, HW)   one image, channel-major, spatially flattened
    s1/b1   : (Cin, 1)       folded BN1 scale / shift (f32)
    w1t     : (C1, Cin)      conv1 weight, transposed (bf16)
    s2/b2   : (C1, 1)        folded BN2 scale / shift (f32)
    w2t     : (9, G, C1)     conv2 weight, per-tap transposed (bf16)
    mask    : (9, 1, HW)     per-tap zero-padding validity mask (f32)
    o_ref   : (1, Cin+G, HW) fused concat output [x ; new_features]
    """
    HW = x_ref.shape[2]

    x_t = x_ref[0]                                               # (Cin, HW) f32

    # ---- BN1 + ReLU (f32 elementwise) ----
    xb = jnp.maximum(x_t * s1_ref[...] + b1_ref[...], 0.0)       # (Cin, HW)

    # ---- 1x1 conv, transposed form: (C1, Cin) @ (Cin, HW) — MXU N = HW ----
    z_t = jnp.dot(w1t_ref[...], xb.astype(jnp.bfloat16),
                  preferred_element_type=jnp.float32)            # (C1, HW) f32

    # ---- BN2 + ReLU ----
    a_t = jnp.maximum(z_t * s2_ref[...] + b2_ref[...], 0.0)      # (C1, HW) f32

    # ---- 3x3 conv (padding=1) as 9 lane-rolled taps of the flat activation.
    # out[:, h*W+w] += w2[dy,dx]^T @ a[:, (h+dy-1)*W + (w+dx-1)]  (masked) ----
    acc = jnp.zeros((G, HW), jnp.float32)
    for t in range(9):
        dy, dx = t // 3, t % 3
        s = (dy - 1) * W + (dx - 1)        # flat source offset for this tap
        rolled = a_t if s == 0 else pltpu.roll(a_t, shift=(-s) % HW, axis=1)
        tap = (rolled * mask_ref[t]).astype(jnp.bfloat16)        # (C1, HW)
        acc = acc + jnp.dot(w2t_ref[t], tap,
                            preferred_element_type=jnp.float32)  # (G, HW)

    # ---- fused channel concat: channels on sublanes, lanes = HW (dense) ----
    o_ref[0, 0:Cin, :] = x_t.astype(o_ref.dtype)
    o_ref[0, Cin:Cin + G, :] = acc.astype(o_ref.dtype)


def dense_layer_forward(x_nchw, params):
    """Pallas implementation of _DenseLayer.forward (inference)."""
    N, Cin, H, W = x_nchw.shape
    HW = H * W
    w1 = params["w1"]                    # (Cin, C1)
    w2 = params["w2"]                    # (3, 3, C1, G)
    C1 = w1.shape[1]
    G = w2.shape[3]
    eps = 1e-5

    # Fold BN into per-channel affine (inference / running-stats form), in f32.
    s1 = params["bn1_gamma"] / jnp.sqrt(params["bn1_var"] + eps)
    b1 = params["bn1_beta"] - params["bn1_mean"] * s1
    s2 = params["bn2_gamma"] / jnp.sqrt(params["bn2_var"] + eps)
    b2 = params["bn2_beta"] - params["bn2_mean"] * s2
    s1 = s1.reshape(Cin, 1).astype(jnp.float32)
    b1 = b1.reshape(Cin, 1).astype(jnp.float32)
    s2 = s2.reshape(C1, 1).astype(jnp.float32)
    b2 = b2.reshape(C1, 1).astype(jnp.float32)

    # Transposed (output-channel-major) weights, bf16 for the MXU.
    w1t = w1.T.astype(jnp.bfloat16)                                  # (C1, Cin)
    w2t = jnp.transpose(w2, (0, 1, 3, 2)).reshape(9, G, C1).astype(jnp.bfloat16)

    # Per-tap validity masks for the zero-padded 3x3 conv (flat spatial index).
    hh = jnp.arange(HW, dtype=jnp.int32) // W
    ww = jnp.arange(HW, dtype=jnp.int32) % W
    masks = []
    for dy in range(3):
        for dx in range(3):
            valid = ((hh + (dy - 1) >= 0) & (hh + (dy - 1) < H) &
                     (ww + (dx - 1) >= 0) & (ww + (dx - 1) < W))
            masks.append(valid)
    mask = jnp.stack(masks, axis=0).astype(jnp.float32).reshape(9, 1, HW)

    # NCHW stays NCHW: flatten spatial dims only (free reshape, no transpose).
    x_flat = x_nchw.reshape(N, Cin, HW).astype(jnp.float32)

    kernel = functools.partial(_dense_layer_kernel, W=W, Cin=Cin, G=G)

    out_flat = pl.pallas_call(
        kernel,
        out_shape=jax.ShapeDtypeStruct((N, Cin + G, HW), jnp.float32),
        grid=(N,),
        in_specs=[
            pl.BlockSpec((1, Cin, HW), lambda n: (n, 0, 0)),     # x
            pl.BlockSpec((Cin, 1), lambda n: (0, 0)),            # s1
            pl.BlockSpec((Cin, 1), lambda n: (0, 0)),            # b1
            pl.BlockSpec((C1, Cin), lambda n: (0, 0)),           # w1^T
            pl.BlockSpec((C1, 1), lambda n: (0, 0)),             # s2
            pl.BlockSpec((C1, 1), lambda n: (0, 0)),             # b2
            pl.BlockSpec((9, G, C1), lambda n: (0, 0, 0)),       # w2^T per tap
            pl.BlockSpec((9, 1, HW), lambda n: (0, 0, 0)),       # tap masks
        ],
        out_specs=pl.BlockSpec((1, Cin + G, HW), lambda n: (n, 0, 0)),
        compiler_params=pltpu.CompilerParams(
            dimension_semantics=("parallel",),
            vmem_limit_bytes=64 * 1024 * 1024),
    )(x_flat, s1, b1, w1t, s2, b2, w2t, mask)

    # (N, Cin+G, HW) -> NCHW is a free reshape: no transpose, no concat glue.
    return out_flat.reshape(N, Cin + G, H, W)


def dense_layer_reference(x_nchw, params):
    """Plain-JAX reference for correctness checking."""
    N, Cin, H, W = x_nchw.shape
    w1, w2 = params["w1"], params["w2"]
    G = w2.shape[3]
    eps = 1e-5
    s1 = params["bn1_gamma"] / jnp.sqrt(params["bn1_var"] + eps)
    b1 = params["bn1_beta"] - params["bn1_mean"] * s1
    s2 = params["bn2_gamma"] / jnp.sqrt(params["bn2_var"] + eps)
    b2 = params["bn2_beta"] - params["bn2_mean"] * s2

    x = jnp.transpose(x_nchw, (0, 2, 3, 1)).astype(jnp.float32)   # NHWC
    xb = jnp.maximum(x * s1 + b1, 0.0)
    z = jnp.einsum("nhwc,cd->nhwd", xb, w1)
    a = jnp.maximum(z * s2 + b2, 0.0)
    a_pad = jnp.pad(a, ((0, 0), (1, 1), (1, 1), (0, 0)))
    out = jnp.zeros((N, H, W, G), jnp.float32)
    for dy in range(3):
        for dx in range(3):
            out = out + jnp.einsum("nhwc,cg->nhwg",
                                   a_pad[:, dy:dy + H, dx:dx + W, :],
                                   w2[dy, dx])
    out_nhwc = jnp.concatenate([x, out], axis=-1)
    return jnp.transpose(out_nhwc, (0, 3, 1, 2))


if __name__ == "__main__":
    # Small shapes consistent with the module:
    #   in_channels=4, growth_rate=8, bn_size=4  ->  C1 = bn_size*growth = 32
    N, Cin, H, W = 2, 4, 16, 16
    growth_rate, bn_size, drop_rate = 8, 4, 0.0
    C1 = bn_size * growth_rate
    G = growth_rate

    key = jax.random.PRNGKey(0)
    ks = jax.random.split(key, 10)
    params = {
        "bn1_gamma": jax.random.uniform(ks[0], (Cin,), jnp.float32, 0.5, 1.5),
        "bn1_beta":  jax.random.normal(ks[1], (Cin,), jnp.float32) * 0.1,
        "bn1_mean":  jax.random.normal(ks[2], (Cin,), jnp.float32) * 0.1,
        "bn1_var":   jax.random.uniform(ks[3], (Cin,), jnp.float32, 0.5, 1.5),
        "w1":        jax.random.normal(ks[4], (Cin, C1), jnp.float32) * 0.2,
        "bn2_gamma": jax.random.uniform(ks[5], (C1,), jnp.float32, 0.5, 1.5),
        "bn2_beta":  jax.random.normal(ks[6], (C1,), jnp.float32) * 0.1,
        "bn2_mean":  jax.random.normal(ks[7], (C1,), jnp.float32) * 0.1,
        "bn2_var":   jax.random.uniform(ks[8], (C1,), jnp.float32, 0.5, 1.5),
        "w2":        jax.random.normal(ks[9], (3, 3, C1, G), jnp.float32) * 0.1,
    }

    x = jax.random.normal(jax.random.PRNGKey(42), (N, Cin, H, W), jnp.float32)

    out = dense_layer_forward(x, params)
    out = jax.block_until_ready(out)

    assert out.shape == (N, Cin + G, H, W), out.shape
    ref = dense_layer_reference(x, params)
    # bf16 MXU operands with f32 accumulation -> loosen tolerance slightly.
    assert jnp.allclose(out, ref, rtol=2e-2, atol=2e-2), \
        float(jnp.max(jnp.abs(out - ref)))

    print("KERNEL_OK")
</pallas_src>

<mosaic_0001>
module attributes {stable_mosaic.version = 11 : i64} {
  func.func @_dense_layer_kernel(%arg0: i32, %arg1: memref<1x4x256xf32, #tpu.memory_space<vmem>>, %arg2: memref<4x1xf32, #tpu.memory_space<vmem>>, %arg3: memref<4x1xf32, #tpu.memory_space<vmem>>, %arg4: memref<32x4xbf16, #tpu.memory_space<vmem>>, %arg5: memref<32x1xf32, #tpu.memory_space<vmem>>, %arg6: memref<32x1xf32, #tpu.memory_space<vmem>>, %arg7: memref<9x8x32xbf16, #tpu.memory_space<vmem>>, %arg8: memref<9x1x256xf32, #tpu.memory_space<vmem>>, %arg9: memref<1x12x256xf32, #tpu.memory_space<vmem>>) attributes {dimension_semantics = [#tpu.dimension_semantics<parallel>], iteration_bounds = array<i64: 2>, scalar_prefetch = 0 : i64, scratch_operands = 0 : i64, tpu.core_type = #tpu.core_type<tc>, window_params = [{transform_indices = @transform_0, window_bounds = array<i64: 1, 4, 256>}, {pipeline_mode = #tpu.pipeline_mode<synchronous>, transform_indices = @transform_1, window_bounds = array<i64: 4, 1>}, {pipeline_mode = #tpu.pipeline_mode<synchronous>, transform_indices = @transform_2, window_bounds = array<i64: 4, 1>}, {pipeline_mode = #tpu.pipeline_mode<synchronous>, transform_indices = @transform_3, window_bounds = array<i64: 32, 4>}, {pipeline_mode = #tpu.pipeline_mode<synchronous>, transform_indices = @transform_4, window_bounds = array<i64: 32, 1>}, {pipeline_mode = #tpu.pipeline_mode<synchronous>, transform_indices = @transform_5, window_bounds = array<i64: 32, 1>}, {pipeline_mode = #tpu.pipeline_mode<synchronous>, transform_indices = @transform_6, window_bounds = array<i64: 9, 8, 32>}, {pipeline_mode = #tpu.pipeline_mode<synchronous>, transform_indices = @transform_7, window_bounds = array<i64: 9, 1, 256>}, {transform_indices = @transform_8, window_bounds = array<i64: 1, 12, 256>}]} {
    %c0 = arith.constant 0 : index
    %c0_0 = arith.constant 0 : index
    %c0_1 = arith.constant 0 : index
    %0 = vector.load %arg1[%c0, %c0_0, %c0_1] : memref<1x4x256xf32, #tpu.memory_space<vmem>>, vector<1x4x256xf32>
    %1 = vector.shape_cast %0 : vector<1x4x256xf32> to vector<4x256xf32>
    %c0_2 = arith.constant 0 : index
    %c0_3 = arith.constant 0 : index
    %2 = vector.load %arg2[%c0_2, %c0_3] : memref<4x1xf32, #tpu.memory_space<vmem>>, vector<4x1xf32>
    %3 = vector.broadcast %2 : vector<4x1xf32> to vector<4x256xf32>
    %4 = arith.mulf %1, %3 : vector<4x256xf32>
    %c0_4 = arith.constant 0 : index
    %c0_5 = arith.constant 0 : index
    %5 = vector.load %arg3[%c0_4, %c0_5] : memref<4x1xf32, #tpu.memory_space<vmem>>, vector<4x1xf32>
    %6 = vector.broadcast %5 : vector<4x1xf32> to vector<4x256xf32>
    %7 = arith.addf %4, %6 : vector<4x256xf32>
    %cst = arith.constant 0.000000e+00 : f32
    %8 = vector.broadcast %cst : f32 to vector<4x256xf32>
    %9 = arith.maximumf %7, %8 : vector<4x256xf32>
    %c0_6 = arith.constant 0 : index
    %c0_7 = arith.constant 0 : index
    %10 = vector.load %arg4[%c0_6, %c0_7] : memref<32x4xbf16, #tpu.memory_space<vmem>>, vector<32x4xbf16>
    %11 = arith.truncf %9 : vector<4x256xf32> to vector<4x256xbf16>
    %cst_8 = arith.constant dense<0.000000e+00> : vector<32x256xf32>
    %12 = tpu.matmul %10, %11, %cst_8 {dimension_numbers = #tpu.dot_dimension_numbers<[1], [0], [0], [1], [0, 0, 1, 1], [], []>} : vector<32x4xbf16>, vector<4x256xbf16>, vector<32x256xf32> -> vector<32x256xf32>
    %c0_9 = arith.constant 0 : index
    %c0_10 = arith.constant 0 : index
    %13 = vector.load %arg5[%c0_9, %c0_10] : memref<32x1xf32, #tpu.memory_space<vmem>>, vector<32x1xf32>
    %14 = vector.broadcast %13 : vector<32x1xf32> to vector<32x256xf32>
    %15 = arith.mulf %12, %14 : vector<32x256xf32>
    %c0_11 = arith.constant 0 : index
    %c0_12 = arith.constant 0 : index
    %16 = vector.load %arg6[%c0_11, %c0_12] : memref<32x1xf32, #tpu.memory_space<vmem>>, vector<32x1xf32>
    %17 = vector.broadcast %16 : vector<32x1xf32> to vector<32x256xf32>
    %18 = arith.addf %15, %17 : vector<32x256xf32>
    %cst_13 = arith.constant 0.000000e+00 : f32
    %19 = vector.broadcast %cst_13 : f32 to vector<32x256xf32>
    %20 = arith.maximumf %18, %19 : vector<32x256xf32>
    %cst_14 = arith.constant 0.000000e+00 : f32
    %21 = vector.broadcast %cst_14 : f32 to vector<8x256xf32>
    %c17_i32 = arith.constant 17 : i32
    %22 = tpu.dynamic_rotate %20 by %c17_i32 dim 1 : vector<32x256xf32>, i32 -> vector<32x256xf32>
    %c0_15 = arith.constant 0 : index
    %c0_16 = arith.constant 0 : index
    %c0_17 = arith.constant 0 : index
    %23 = vector.load %arg8[%c0_15, %c0_16, %c0_17] : memref<9x1x256xf32, #tpu.memory_space<vmem>>, vector<1x1x256xf32>
    %24 = vector.shape_cast %23 : vector<1x1x256xf32> to vector<1x256xf32>
    %25 = vector.broadcast %24 : vector<1x256xf32> to vector<32x256xf32>
    %26 = arith.mulf %22, %25 : vector<32x256xf32>
    %27 = arith.truncf %26 : vector<32x256xf32> to vector<32x256xbf16>
    %c0_18 = arith.constant 0 : index
    %c0_19 = arith.constant 0 : index
    %c0_20 = arith.constant 0 : index
    %28 = vector.load %arg7[%c0_18, %c0_19, %c0_20] : memref<9x8x32xbf16, #tpu.memory_space<vmem>>, vector<1x8x32xbf16>
    %29 = vector.shape_cast %28 : vector<1x8x32xbf16> to vector<8x32xbf16>
    %cst_21 = arith.constant dense<0.000000e+00> : vector<8x256xf32>
    %30 = tpu.matmul %29, %27, %cst_21 {dimension_numbers = #tpu.dot_dimension_numbers<[1], [0], [0], [1], [0, 0, 1, 1], [], []>} : vector<8x32xbf16>, vector<32x256xbf16>, vector<8x256xf32> -> vector<8x256xf32>
    %31 = arith.addf %21, %30 : vector<8x256xf32>
    %c16_i32 = arith.constant 16 : i32
    %32 = tpu.dynamic_rotate %20 by %c16_i32 dim 1 : vector<32x256xf32>, i32 -> vector<32x256xf32>
    %c1 = arith.constant 1 : index
    %c0_22 = arith.constant 0 : index
    %c0_23 = arith.constant 0 : index
    %33 = vector.load %arg8[%c1, %c0_22, %c0_23] : memref<9x1x256xf32, #tpu.memory_space<vmem>>, vector<1x1x256xf32>
    %34 = vector.shape_cast %33 : vector<1x1x256xf32> to vector<1x256xf32>
    %35 = vector.broadcast %34 : vector<1x256xf32> to vector<32x256xf32>
    %36 = arith.mulf %32, %35 : vector<32x256xf32>
    %37 = arith.truncf %36 : vector<32x256xf32> to vector<32x256xbf16>
    %c1_24 = arith.constant 1 : index
    %c0_25 = arith.constant 0 : index
    %c0_26 = arith.constant 0 : index
    %38 = vector.load %arg7[%c1_24, %c0_25, %c0_26] : memref<9x8x32xbf16, #tpu.memory_space<vmem>>, vector<1x8x32xbf16>
    %39 = vector.shape_cast %38 : vector<1x8x32xbf16> to vector<8x32xbf16>
    %cst_27 = arith.constant dense<0.000000e+00> : vector<8x256xf32>
    %40 = tpu.matmul %39, %37, %cst_27 {dimension_numbers = #tpu.dot_dimension_numbers<[1], [0], [0], [1], [0, 0, 1, 1], [], []>} : vector<8x32xbf16>, vector<32x256xbf16>, vector<8x256xf32> -> vector<8x256xf32>
    %41 = arith.addf %31, %40 : vector<8x256xf32>
    %c15_i32 = arith.constant 15 : i32
    %42 = tpu.dynamic_rotate %20 by %c15_i32 dim 1 : vector<32x256xf32>, i32 -> vector<32x256xf32>
    %c2 = arith.constant 2 : index
    %c0_28 = arith.constant 0 : index
    %c0_29 = arith.constant 0 : index
    %43 = vector.load %arg8[%c2, %c0_28, %c0_29] : memref<9x1x256xf32, #tpu.memory_space<vmem>>, vector<1x1x256xf32>
    %44 = vector.shape_cast %43 : vector<1x1x256xf32> to vector<1x256xf32>
    %45 = vector.broadcast %44 : vector<1x256xf32> to vector<32x256xf32>
    %46 = arith.mulf %42, %45 : vector<32x256xf32>
    %47 = arith.truncf %46 : vector<32x256xf32> to vector<32x256xbf16>
    %c2_30 = arith.constant 2 : index
    %c0_31 = arith.constant 0 : index
    %c0_32 = arith.constant 0 : index
    %48 = vector.load %arg7[%c2_30, %c0_31, %c0_32] : memref<9x8x32xbf16, #tpu.memory_space<vmem>>, vector<1x8x32xbf16>
    %49 = vector.shape_cast %48 : vector<1x8x32xbf16> to vector<8x32xbf16>
    %cst_33 = arith.constant dense<0.000000e+00> : vector<8x256xf32>
    %50 = tpu.matmul %49, %47, %cst_33 {dimension_numbers = #tpu.dot_dimension_numbers<[1], [0], [0], [1], [0, 0, 1, 1], [], []>} : vector<8x32xbf16>, vector<32x256xbf16>, vector<8x256xf32> -> vector<8x256xf32>
    %51 = arith.addf %41, %50 : vector<8x256xf32>
    %c1_i32 = arith.constant 1 : i32
    %52 = tpu.dynamic_rotate %20 by %c1_i32 dim 1 : vector<32x256xf32>, i32 -> vector<32x256xf32>
    %c3 = arith.constant 3 : index
    %c0_34 = arith.constant 0 : index
    %c0_35 = arith.constant 0 : index
    %53 = vector.load %arg8[%c3, %c0_34, %c0_35] : memref<9x1x256xf32, #tpu.memory_space<vmem>>, vector<1x1x256xf32>
    %54 = vector.shape_cast %53 : vector<1x1x256xf32> to vector<1x256xf32>
    %55 = vector.broadcast %54 : vector<1x256xf32> to vector<32x256xf32>
    %56 = arith.mulf %52, %55 : vector<32x256xf32>
    %57 = arith.truncf %56 : vector<32x256xf32> to vector<32x256xbf16>
    %c3_36 = arith.constant 3 : index
    %c0_37 = arith.constant 0 : index
    %c0_38 = arith.constant 0 : index
    %58 = vector.load %arg7[%c3_36, %c0_37, %c0_38] : memref<9x8x32xbf16, #tpu.memory_space<vmem>>, vector<1x8x32xbf16>
    %59 = vector.shape_cast %58 : vector<1x8x32xbf16> to vector<8x32xbf16>
    %cst_39 = arith.constant dense<0.000000e+00> : vector<8x256xf32>
    %60 = tpu.matmul %59, %57, %cst_39 {dimension_numbers = #tpu.dot_dimension_numbers<[1], [0], [0], [1], [0, 0, 1, 1], [], []>} : vector<8x32xbf16>, vector<32x256xbf16>, vector<8x256xf32> -> vector<8x256xf32>
    %61 = arith.addf %51, %60 : vector<8x256xf32>
    %c4 = arith.constant 4 : index
    %c0_40 = arith.constant 0 : index
    %c0_41 = arith.constant 0 : index
    %62 = vector.load %arg8[%c4, %c0_40, %c0_41] : memref<9x1x256xf32, #tpu.memory_space<vmem>>, vector<1x1x256xf32>
    %63 = vector.shape_cast %62 : vector<1x1x256xf32> to vector<1x256xf32>
    %64 = vector.broadcast %63 : vector<1x256xf32> to vector<32x256xf32>
    %65 = arith.mulf %20, %64 : vector<32x256xf32>
    %66 = arith.truncf %65 : vector<32x256xf32> to vector<32x256xbf16>
    %c4_42 = arith.constant 4 : index
    %c0_43 = arith.constant 0 : index
    %c0_44 = arith.constant 0 : index
    %67 = vector.load %arg7[%c4_42, %c0_43, %c0_44] : memref<9x8x32xbf16, #tpu.memory_space<vmem>>, vector<1x8x32xbf16>
    %68 = vector.shape_cast %67 : vector<1x8x32xbf16> to vector<8x32xbf16>
    %cst_45 = arith.constant dense<0.000000e+00> : vector<8x256xf32>
    %69 = tpu.matmul %68, %66, %cst_45 {dimension_numbers = #tpu.dot_dimension_numbers<[1], [0], [0], [1], [0, 0, 1, 1], [], []>} : vector<8x32xbf16>, vector<32x256xbf16>, vector<8x256xf32> -> vector<8x256xf32>
    %70 = arith.addf %61, %69 : vector<8x256xf32>
    %c255_i32 = arith.constant 255 : i32
    %71 = tpu.dynamic_rotate %20 by %c255_i32 dim 1 : vector<32x256xf32>, i32 -> vector<32x256xf32>
    %c5 = arith.constant 5 : index
    %c0_46 = arith.constant 0 : index
    %c0_47 = arith.constant 0 : index
    %72 = vector.load %arg8[%c5, %c0_46, %c0_47] : memref<9x1x256xf32, #tpu.memory_space<vmem>>, vector<1x1x256xf32>
    %73 = vector.shape_cast %72 : vector<1x1x256xf32> to vector<1x256xf32>
    %74 = vector.broadcast %73 : vector<1x256xf32> to vector<32x256xf32>
    %75 = arith.mulf %71, %74 : vector<32x256xf32>
    %76 = arith.truncf %75 : vector<32x256xf32> to vector<32x256xbf16>
    %c5_48 = arith.constant 5 : index
    %c0_49 = arith.constant 0 : index
    %c0_50 = arith.constant 0 : index
    %77 = vector.load %arg7[%c5_48, %c0_49, %c0_50] : memref<9x8x32xbf16, #tpu.memory_space<vmem>>, vector<1x8x32xbf16>
    %78 = vector.shape_cast %77 : vector<1x8x32xbf16> to vector<8x32xbf16>
    %cst_51 = arith.constant dense<0.000000e+00> : vector<8x256xf32>
    %79 = tpu.matmul %78, %76, %cst_51 {dimension_numbers = #tpu.dot_dimension_numbers<[1], [0], [0], [1], [0, 0, 1, 1], [], []>} : vector<8x32xbf16>, vector<32x256xbf16>, vector<8x256xf32> -> vector<8x256xf32>
    %80 = arith.addf %70, %79 : vector<8x256xf32>
    %c241_i32 = arith.constant 241 : i32
    %81 = tpu.dynamic_rotate %20 by %c241_i32 dim 1 : vector<32x256xf32>, i32 -> vector<32x256xf32>
    %c6 = arith.constant 6 : index
    %c0_52 = arith.constant 0 : index
    %c0_53 = arith.constant 0 : index
    %82 = vector.load %arg8[%c6, %c0_52, %c0_53] : memref<9x1x256xf32, #tpu.memory_space<vmem>>, vector<1x1x256xf32>
    %83 = vector.shape_cast %82 : vector<1x1x256xf32> to vector<1x256xf32>
    %84 = vector.broadcast %83 : vector<1x256xf32> to vector<32x256xf32>
    %85 = arith.mulf %81, %84 : vector<32x256xf32>
    %86 = arith.truncf %85 : vector<32x256xf32> to vector<32x256xbf16>
    %c6_54 = arith.constant 6 : index
    %c0_55 = arith.constant 0 : index
    %c0_56 = arith.constant 0 : index
    %87 = vector.load %arg7[%c6_54, %c0_55, %c0_56] : memref<9x8x32xbf16, #tpu.memory_space<vmem>>, vector<1x8x32xbf16>
    %88 = vector.shape_cast %87 : vector<1x8x32xbf16> to vector<8x32xbf16>
    %cst_57 = arith.constant dense<0.000000e+00> : vector<8x256xf32>
    %89 = tpu.matmul %88, %86, %cst_57 {dimension_numbers = #tpu.dot_dimension_numbers<[1], [0], [0], [1], [0, 0, 1, 1], [], []>} : vector<8x32xbf16>, vector<32x256xbf16>, vector<8x256xf32> -> vector<8x256xf32>
    %90 = arith.addf %80, %89 : vector<8x256xf32>
    %c240_i32 = arith.constant 240 : i32
    %91 = tpu.dynamic_rotate %20 by %c240_i32 dim 1 : vector<32x256xf32>, i32 -> vector<32x256xf32>
    %c7 = arith.constant 7 : index
    %c0_58 = arith.constant 0 : index
    %c0_59 = arith.constant 0 : index
    %92 = vector.load %arg8[%c7, %c0_58, %c0_59] : memref<9x1x256xf32, #tpu.memory_space<vmem>>, vector<1x1x256xf32>
    %93 = vector.shape_cast %92 : vector<1x1x256xf32> to vector<1x256xf32>
    %94 = vector.broadcast %93 : vector<1x256xf32> to vector<32x256xf32>
    %95 = arith.mulf %91, %94 : vector<32x256xf32>
    %96 = arith.truncf %95 : vector<32x256xf32> to vector<32x256xbf16>
    %c7_60 = arith.constant 7 : index
    %c0_61 = arith.constant 0 : index
    %c0_62 = arith.constant 0 : index
    %97 = vector.load %arg7[%c7_60, %c0_61, %c0_62] : memref<9x8x32xbf16, #tpu.memory_space<vmem>>, vector<1x8x32xbf16>
    %98 = vector.shape_cast %97 : vector<1x8x32xbf16> to vector<8x32xbf16>
    %cst_63 = arith.constant dense<0.000000e+00> : vector<8x256xf32>
    %99 = tpu.matmul %98, %96, %cst_63 {dimension_numbers = #tpu.dot_dimension_numbers<[1], [0], [0], [1], [0, 0, 1, 1], [], []>} : vector<8x32xbf16>, vector<32x256xbf16>, vector<8x256xf32> -> vector<8x256xf32>
    %100 = arith.addf %90, %99 : vector<8x256xf32>
    %c239_i32 = arith.constant 239 : i32
    %101 = tpu.dynamic_rotate %20 by %c239_i32 dim 1 : vector<32x256xf32>, i32 -> vector<32x256xf32>
    %c8 = arith.constant 8 : index
    %c0_64 = arith.constant 0 : index
    %c0_65 = arith.constant 0 : index
    %102 = vector.load %arg8[%c8, %c0_64, %c0_65] : memref<9x1x256xf32, #tpu.memory_space<vmem>>, vector<1x1x256xf32>
    %103 = vector.shape_cast %102 : vector<1x1x256xf32> to vector<1x256xf32>
    %104 = vector.broadcast %103 : vector<1x256xf32> to vector<32x256xf32>
    %105 = arith.mulf %101, %104 : vector<32x256xf32>
    %106 = arith.truncf %105 : vector<32x256xf32> to vector<32x256xbf16>
    %c8_66 = arith.constant 8 : index
    %c0_67 = arith.constant 0 : index
    %c0_68 = arith.constant 0 : index
    %107 = vector.load %arg7[%c8_66, %c0_67, %c0_68] : memref<9x8x32xbf16, #tpu.memory_space<vmem>>, vector<1x8x32xbf16>
    %108 = vector.shape_cast %107 : vector<1x8x32xbf16> to vector<8x32xbf16>
    %cst_69 = arith.constant dense<0.000000e+00> : vector<8x256xf32>
    %109 = tpu.matmul %108, %106, %cst_69 {dimension_numbers = #tpu.dot_dimension_numbers<[1], [0], [0], [1], [0, 0, 1, 1], [], []>} : vector<8x32xbf16>, vector<32x256xbf16>, vector<8x256xf32> -> vector<8x256xf32>
    %110 = arith.addf %100, %109 : vector<8x256xf32>
    %c0_70 = arith.constant 0 : index
    %c0_71 = arith.constant 0 : index
    %c0_72 = arith.constant 0 : index
    %111 = vector.load %arg9[%c0_70, %c0_71, %c0_72] : memref<1x12x256xf32, #tpu.memory_space<vmem>>, vector<1x4x256xf32>
    %112 = vector.shape_cast %111 : vector<1x4x256xf32> to vector<4x256xf32>
    %113 = vector.shape_cast %1 : vector<4x256xf32> to vector<1x4x256xf32>
    tpu.vector_store %arg9[%c0_70, %c0_71, %c0_72], %113 {strides = array<i32>} : memref<1x12x256xf32, #tpu.memory_space<vmem>>, vector<1x4x256xf32>,
    %c0_73 = arith.constant 0 : index
    %c4_74 = arith.constant 4 : index
    %c0_75 = arith.constant 0 : index
    %114 = vector.load %arg9[%c0_73, %c4_74, %c0_75] : memref<1x12x256xf32, #tpu.memory_space<vmem>>, vector<1x8x256xf32>
    %115 = vector.shape_cast %114 : vector<1x8x256xf32> to vector<8x256xf32>
    %116 = vector.shape_cast %110 : vector<8x256xf32> to vector<1x8x256xf32>
    tpu.vector_store %arg9[%c0_73, %c4_74, %c0_75], %116 {strides = array<i32>} : memref<1x12x256xf32, #tpu.memory_space<vmem>>, vector<1x8x256xf32>,
    return
  }
  func.func @transform_0(%arg0: i32) -> (i32, i32, i32) {
    %c0_i32 = arith.constant 0 : i32
    %c0_i32_0 = arith.constant 0 : i32
    %c0_i32_1 = arith.constant 0 : i32
    return %arg0, %c0_i32, %c0_i32_0 : i32, i32, i32
  }
  func.func @transform_1(%arg0: i32) -> (i32, i32) {
    %c0_i32 = arith.constant 0 : i32
    %c0_i32_0 = arith.constant 0 : i32
    %c0_i32_1 = arith.constant 0 : i32
    return %c0_i32, %c0_i32_0 : i32, i32
  }
  func.func @transform_2(%arg0: i32) -> (i32, i32) {
    %c0_i32 = arith.constant 0 : i32
    %c0_i32_0 = arith.constant 0 : i32
    %c0_i32_1 = arith.constant 0 : i32
    return %c0_i32, %c0_i32_0 : i32, i32
  }
  func.func @transform_3(%arg0: i32) -> (i32, i32) {
    %c0_i32 = arith.constant 0 : i32
    %c0_i32_0 = arith.constant 0 : i32
    %c0_i32_1 = arith.constant 0 : i32
    return %c0_i32, %c0_i32_0 : i32, i32
  }
  func.func @transform_4(%arg0: i32) -> (i32, i32) {
    %c0_i32 = arith.constant 0 : i32
    %c0_i32_0 = arith.constant 0 : i32
    %c0_i32_1 = arith.constant 0 : i32
    return %c0_i32, %c0_i32_0 : i32, i32
  }
  func.func @transform_5(%arg0: i32) -> (i32, i32) {
    %c0_i32 = arith.constant 0 : i32
    %c0_i32_0 = arith.constant 0 : i32
    %c0_i32_1 = arith.constant 0 : i32
    return %c0_i32, %c0_i32_0 : i32, i32
  }
  func.func @transform_6(%arg0: i32) -> (i32, i32, i32) {
    %c0_i32 = arith.constant 0 : i32
    %c0_i32_0 = arith.constant 0 : i32
    %c0_i32_1 = arith.constant 0 : i32
    %c0_i32_2 = arith.constant 0 : i32
    return %c0_i32, %c0_i32_0, %c0_i32_1 : i32, i32, i32
  }
  func.func @transform_7(%arg0: i32) -> (i32, i32, i32) {
    %c0_i32 = arith.constant 0 : i32
    %c0_i32_0 = arith.constant 0 : i32
    %c0_i32_1 = arith.constant 0 : i32
    %c0_i32_2 = arith.constant 0 : i32
    return %c0_i32, %c0_i32_0, %c0_i32_1 : i32, i32, i32
  }
  func.func @transform_8(%arg0: i32) -> (i32, i32, i32) {
    %c0_i32 = arith.constant 0 : i32
    %c0_i32_0 = arith.constant 0 : i32
    %c0_i32_1 = arith.constant 0 : i32
    return %arg0, %c0_i32, %c0_i32_0 : i32, i32, i32
  }
}

</mosaic_0001>

<llo_original>
// kernel: tpu_custom_call.1
$region0: #{tpu_custom_call.1}
  #allocation0 [shape = 'u32[]', space=smem, size = 0x4, offset = 0x4, fixed_abs, tag = 'smem constant byte address 0x4 - core index']
  #allocation1 [shape = 'u32[144,128]{1,0:T(1,128)}', space=vmem, size = 0x12000, scoped, tag = 'internal scratch']
  %s0 = inlined_call_operand.hbm [shape: f32[2,4,256], index: 0, kind: input, shape index: {}]
  %s1 = inlined_call_operand.hbm [shape: f32[4,1], index: 1, kind: input, shape index: {}]
  %s2 = inlined_call_operand.hbm [shape: f32[4,1], index: 2, kind: input, shape index: {}]
  %s3 = inlined_call_operand.hbm [shape: bf16[32,4], index: 3, kind: input, shape index: {}]
  %s4 = inlined_call_operand.hbm [shape: f32[32,1], index: 4, kind: input, shape index: {}]
  %s5 = inlined_call_operand.hbm [shape: f32[32,1], index: 5, kind: input, shape index: {}]
  %s6 = inlined_call_operand.hbm [shape: bf16[9,8,32], index: 6, kind: input, shape index: {}]
  %s7 = inlined_call_operand.hbm [shape: f32[9,1,256], index: 7, kind: input, shape index: {}]
  %s8 = inlined_call_operand.hbm [shape: f32[2,12,256], index: 8, kind: output, shape index: {}]
  %s9 = sld [smem:[#allocation0]]
  $region97: #{tpu_custom_call.1} parent=0
    _
  %s11 = ssub.s32 1, %s9
  %s12 = scalar_select 0, %s11, %s9
  $region1: #{tpu_custom_call.1} parent=0
    #allocation2 [shape = 'u8[8192]{0}', space=vmem, size = 0x2000, scoped, tag = 'input window, operand 0']
    #allocation3 [shape = 's32[2]{0}', space=sflag, size = 0x8, scoped, tag = 'scoped memory for tpu_custom_call.1']
    #allocation4 [shape = 's32[2]{0}', space=sflag, size = 0x8, scoped, tag = 'scoped memory for tpu_custom_call.1']
    #allocation5 [shape = 'u8[2048]{0}', space=vmem, size = 0x800, scoped, tag = 'input window, operand 1, single buffered']
    #allocation6 [shape = 's32[1]{0}', space=sflag, size = 0x4, scoped, tag = 'scoped memory for tpu_custom_call.1']
    #allocation7 [shape = 'u8[2048]{0}', space=vmem, size = 0x800, scoped, tag = 'input window, operand 2, single buffered']
    #allocation8 [shape = 'u8[8192]{0}', space=vmem, size = 0x2000, scoped, tag = 'input window, operand 3, single buffered']
    #allocation9 [shape = 's32[1]{0}', space=sflag, size = 0x4, scoped, tag = 'scoped memory for tpu_custom_call.1']
    #allocation10 [shape = 'u8[16384]{0}', space=vmem, size = 0x4000, scoped, tag = 'input window, operand 4, single buffered']
    #allocation11 [shape = 'u8[16384]{0}', space=vmem, size = 0x4000, scoped, tag = 'input window, operand 5, single buffered']
    #allocation12 [shape = 's32[1]{0}', space=sflag, size = 0x4, scoped, tag = 'scoped memory for tpu_custom_call.1']
    #allocation13 [shape = 'u8[18432]{0}', space=vmem, size = 0x4800, scoped, tag = 'input window, operand 6, single buffered']
    #allocation14 [shape = 'u8[9216]{0}', space=vmem, size = 0x2400, scoped, tag = 'input window, operand 7, single buffered']
    #allocation15 [shape = 's32[1]{0}', space=sflag, size = 0x4, scoped, tag = 'scoped memory for tpu_custom_call.1']
    #allocation16 [shape = 'u8[32768]{0}', space=vmem, size = 0x8000, scoped, tag = 'output window, operand 0']
    %13 = vsyncpa [#allocation3], 0
    %s14 = scalar_lea.sflag [#allocation3], 1
    %15 = vsyncpa %s14, 0
    %16 = vsyncpa [#allocation6], 0
    %17 = vsyncpa [#allocation9], 0
    %18 = vsyncpa [#allocation12], 0
    %19 = vsyncpa [#allocation15], 0
    %20 = vsyncpa [#allocation4], 0
    %s21 = scalar_lea.sflag [#allocation4], 1
    %22 = vsyncpa %s21, 0
    loop: start=0, step=1, limit=4
    $region2: #{tpu_custom_call.1} parent=1 // loop_pre_header
      _
    $region3: #{tpu_custom_call.1} parent=1 // loop_header
      %s24 = sphi 0, %s28
      %p25 = scmp.ge.s32.totalorder %s24, 4
      %s34 = sphi 0, %s36
      %s37 = sphi 0, %s34
      %s38 = sphi 0, %s37
      %s54 = sphi 0, %s38
      %s58 = sphi 0, %s58
      %s60 = sphi 0, %s58
      %s61 = sphi 0, %s60
      %s75 = sphi 0, %s61
      %s79 = sphi 0, %s79
      %s81 = sphi 0, %s79
      %s82 = sphi 0, %s81
      %s96 = sphi 0, %s82
      %s100 = sphi 0, %s100
      %s102 = sphi 0, %s100
      %s103 = sphi 0, %s102
      %s117 = sphi 0, %s103
      %s121 = sphi 0, %s121
      %s123 = sphi 0, %s121
      %s124 = sphi 0, %s123
      %s138 = sphi 0, %s124
      %s142 = sphi 0, %s142
      %s144 = sphi 0, %s142
      %s145 = sphi 0, %s144
      %s159 = sphi 0, %s145
      %s163 = sphi 0, %s163
      %s165 = sphi 0, %s163
      %s166 = sphi 0, %s165
      %s180 = sphi 0, %s166
      %s184 = sphi 0, %s184
      %s186 = sphi 0, %s184
      %s187 = sphi 0, %s186
      %s201 = sphi 0, %s187
      %s207 = sphi 0, %s209
      %s210 = sphi 0, %s207
      %s211 = sphi 0, %s210
      %s227 = sphi 0, %s211
    $region4: #{tpu_custom_call.1} parent=1 // loop_header_branch
      %27 = sbr.rel (%p25) target = $region8
    $region5: #{tpu_custom_call.1} parent=1 // loop_body
      %s29 = ssub.s32 %s24, 1
      %s30 = ssub.s32 %s24, 2
      %s31 = sadd.s32 %s24, 1
      %s32 = ssub.s32 %s24, %s31
      %p33 = scmp.eq.s32.totalorder %s32, 0
      %s35 = sadd.s32 %s34, 1
      %s36 = scalar_select %p33, %s34, %s35
      %p39 = pneg %p33
      %p40 = scmp.eq.s32.totalorder %s24, 1
      %p41 = por %p39, %p40
      %p42 = scmp.ne.s32.totalorder %s34, %s37
      %p43 = scmp.eq.s32.totalorder %s24, 0
      %p44 = por %p42, %p43
      %p45 = scmp.ne.s32.totalorder %s34, %s37
      %p46 = scmp.eq.s32.totalorder %s29, 1
      %p47 = por %p45, %p46
      %p48 = scmp.ne.s32.totalorder %s37, %s38
      %p49 = scmp.eq.s32.totalorder %s29, 0
      %p50 = por %p48, %p49
      %p51 = scmp.ne.s32.totalorder %s37, %s38
      %p52 = scmp.eq.s32.totalorder %s30, 1
      %p53 = por %p51, %p52
      %p55 = scmp.ne.s32.totalorder %s38, %s54
      %p56 = scmp.eq.s32.totalorder %s30, 0
      %p57 = por %p55, %p56
      %s59 = sadd.s32 %s58, 1
      %p62 = scmp.eq.s32.totalorder %s24, 1
      %p63 = scmp.ne.s32.totalorder %s58, %s60
      %p64 = scmp.eq.s32.totalorder %s24, 0
      %p65 = por %p63, %p64
      %p66 = scmp.ne.s32.totalorder %s58, %s60
      %p67 = scmp.eq.s32.totalorder %s29, 1
      %p68 = por %p66, %p67
      %p69 = scmp.ne.s32.totalorder %s60, %s61
      %p70 = scmp.eq.s32.totalorder %s29, 0
      %p71 = por %p69, %p70
      %p72 = scmp.ne.s32.totalorder %s60, %s61
      %p73 = scmp.eq.s32.totalorder %s30, 1
      %p74 = por %p72, %p73
      %p76 = scmp.ne.s32.totalorder %s61, %s75
      %p77 = scmp.eq.s32.totalorder %s30, 0
      %p78 = por %p76, %p77
      %s80 = sadd.s32 %s79, 1
      %p83 = scmp.eq.s32.totalorder %s24, 1
      %p84 = scmp.ne.s32.totalorder %s79, %s81
      %p85 = scmp.eq.s32.totalorder %s24, 0
      %p86 = por %p84, %p85
      %p87 = scmp.ne.s32.totalorder %s79, %s81
      %p88 = scmp.eq.s32.totalorder %s29, 1
      %p89 = por %p87, %p88
      %p90 = scmp.ne.s32.totalorder %s81, %s82
      %p91 = scmp.eq.s32.totalorder %s29, 0
      %p92 = por %p90, %p91
      %p93 = scmp.ne.s32.totalorder %s81, %s82
      %p94 = scmp.eq.s32.totalorder %s30, 1
      %p95 = por %p93, %p94
      %p97 = scmp.ne.s32.totalorder %s82, %s96
      %p98 = scmp.eq.s32.totalorder %s30, 0
      %p99 = por %p97, %p98
      %s101 = sadd.s32 %s100, 1
      %p104 = scmp.eq.s32.totalorder %s24, 1
      %p105 = scmp.ne.s32.totalorder %s100, %s102
      %p106 = scmp.eq.s32.totalorder %s24, 0
      %p107 = por %p105, %p106
      %p108 = scmp.ne.s32.totalorder %s100, %s102
      %p109 = scmp.eq.s32.totalorder %s29, 1
      %p110 = por %p108, %p109
      %p111 = scmp.ne.s32.totalorder %s102, %s103
      %p112 = scmp.eq.s32.totalorder %s29, 0
      %p113 = por %p111, %p112
      %p114 = scmp.ne.s32.totalorder %s102, %s103
      %p115 = scmp.eq.s32.totalorder %s30, 1
      %p116 = por %p114, %p115
      %p118 = scmp.ne.s32.totalorder %s103, %s117
      %p119 = scmp.eq.s32.totalorder %s30, 0
      %p120 = por %p118, %p119
      %s122 = sadd.s32 %s121, 1
      %p125 = scmp.eq.s32.totalorder %s24, 1
      %p126 = scmp.ne.s32.totalorder %s121, %s123
      %p127 = scmp.eq.s32.totalorder %s24, 0
      %p128 = por %p126, %p127
      %p129 = scmp.ne.s32.totalorder %s121, %s123
      %p130 = scmp.eq.s32.totalorder %s29, 1
      %p131 = por %p129, %p130
      %p132 = scmp.ne.s32.totalorder %s123, %s124
      %p133 = scmp.eq.s32.totalorder %s29, 0
      %p134 = por %p132, %p133
      %p135 = scmp.ne.s32.totalorder %s123, %s124
      %p136 = scmp.eq.s32.totalorder %s30, 1
      %p137 = por %p135, %p136
      %p139 = scmp.ne.s32.totalorder %s124, %s138
      %p140 = scmp.eq.s32.totalorder %s30, 0
      %p141 = por %p139, %p140
      %s143 = sadd.s32 %s142, 1
      %p146 = scmp.eq.s32.totalorder %s24, 1
      %p147 = scmp.ne.s32.totalorder %s142, %s144
      %p148 = scmp.eq.s32.totalorder %s24, 0
      %p149 = por %p147, %p148
      %p150 = scmp.ne.s32.totalorder %s142, %s144
      %p151 = scmp.eq.s32.totalorder %s29, 1
      %p152 = por %p150, %p151
      %p153 = scmp.ne.s32.totalorder %s144, %s145
      %p154 = scmp.eq.s32.totalorder %s29, 0
      %p155 = por %p153, %p154
      %p156 = scmp.ne.s32.totalorder %s144, %s145
      %p157 = scmp.eq.s32.totalorder %s30, 1
      %p158 = por %p156, %p157
      %p160 = scmp.ne.s32.totalorder %s145, %s159
      %p161 = scmp.eq.s32.totalorder %s30, 0
      %p162 = por %p160, %p161
      %s164 = sadd.s32 %s163, 1
      %p167 = scmp.eq.s32.totalorder %s24, 1
      %p168 = scmp.ne.s32.totalorder %s163, %s165
      %p169 = scmp.eq.s32.totalorder %s24, 0
      %p170 = por %p168, %p169
      %p171 = scmp.ne.s32.totalorder %s163, %s165
      %p172 = scmp.eq.s32.totalorder %s29, 1
      %p173 = por %p171, %p172
      %p174 = scmp.ne.s32.totalorder %s165, %s166
      %p175 = scmp.eq.s32.totalorder %s29, 0
      %p176 = por %p174, %p175
      %p177 = scmp.ne.s32.totalorder %s165, %s166
      %p178 = scmp.eq.s32.totalorder %s30, 1
      %p179 = por %p177, %p178
      %p181 = scmp.ne.s32.totalorder %s166, %s180
      %p182 = scmp.eq.s32.totalorder %s30, 0
      %p183 = por %p181, %p182
      %s185 = sadd.s32 %s184, 1
      %p188 = scmp.eq.s32.totalorder %s24, 1
      %p189 = scmp.ne.s32.totalorder %s184, %s186
      %p190 = scmp.eq.s32.totalorder %s24, 0
      %p191 = por %p189, %p190
      %p192 = scmp.ne.s32.totalorder %s184, %s186
      %p193 = scmp.eq.s32.totalorder %s29, 1
      %p194 = por %p192, %p193
      %p195 = scmp.ne.s32.totalorder %s186, %s187
      %p196 = scmp.eq.s32.totalorder %s29, 0
      %p197 = por %p195, %p196
      %p198 = scmp.ne.s32.totalorder %s186, %s187
      %p199 = scmp.eq.s32.totalorder %s30, 1
      %p200 = por %p198, %p199
      %p202 = scmp.ne.s32.totalorder %s187, %s201
      %p203 = scmp.eq.s32.totalorder %s30, 0
      %p204 = por %p202, %p203
      %s205 = ssub.s32 %s24, %s31
      %p206 = scmp.eq.s32.totalorder %s205, 0
      %s208 = sadd.s32 %s207, 1
      %s209 = scalar_select %p206, %s207, %s208
      %p212 = pneg %p206
      %p213 = scmp.eq.s32.totalorder %s24, 1
      %p214 = por %p212, %p213
      %p215 = scmp.ne.s32.totalorder %s207, %s210
      %p216 = scmp.eq.s32.totalorder %s24, 0
      %p217 = por %p215, %p216
      %p218 = scmp.ne.s32.totalorder %s207, %s210
      %p219 = scmp.eq.s32.totalorder %s29, 1
      %p220 = por %p218, %p219
      %p221 = scmp.ne.s32.totalorder %s210, %s211
      %p222 = scmp.eq.s32.totalorder %s29, 0
      %p223 = por %p221, %p222
      %p224 = scmp.ne.s32.totalorder %s210, %s211
      %p225 = scmp.eq.s32.totalorder %s30, 1
      %p226 = por %p224, %p225
      %p228 = scmp.ne.s32.totalorder %s211, %s227
      %p229 = scmp.eq.s32.totalorder %s30, 0
      %p230 = por %p228, %p229
      %p231 = scmp.le.s32.totalorder 1, %s24
      %p232 = scmp.lt.s32.totalorder %s24, 3
      %p233 = pnand %p231, %p232
      %p234 = pneg %p233
      // Predicated region
      $region9: #{tpu_custom_call.1} parent=5 // pred_check
        _
      $region10: #{tpu_custom_call.1} parent=5 // pred_check_branch
        %236 = sbr.rel (%p233) target = $region12
      $region11: #{tpu_custom_call.1} parent=5 // pred_region
        %s237 = ssub.s32 %s24, 1
        // Predicated region
        $region13: #{tpu_custom_call.1} parent=11 // pred_check
          %p238 = pneg %p71
        $region14: #{tpu_custom_call.1} parent=11 // pred_check_branch
          %240 = sbr.rel (%p238) target = $region16
        $region15: #{tpu_custom_call.1} parent=11 // pred_region
          %s242 = ssub.s32 64, 64
          %243 = vsyncadd [#allocation6], %s242
          %s245 = sshll.u32 [#allocation5], 4
          %s246 = int_to_ptr.vmem [resolvable:$true] %s245
          %248 = dma.hbm_to_vmem [thread:$0]  %s1, 64, %s246, [#allocation6]
        $region16: #{tpu_custom_call.1} parent=11 // pred_fallthru
          _
        // Predicated region
        $region17: #{tpu_custom_call.1} parent=11 // pred_check
          %p249 = pneg %p92
        $region18: #{tpu_custom_call.1} parent=11 // pred_check_branch
          %251 = sbr.rel (%p249) target = $region20
        $region19: #{tpu_custom_call.1} parent=11 // pred_region
          %s253 = ssub.s32 64, 64
          %254 = vsyncadd [#allocation6], %s253
          %s256 = sshll.u32 [#allocation7], 4
          %s257 = int_to_ptr.vmem [resolvable:$true] %s256
          %259 = dma.hbm_to_vmem [thread:$0]  %s2, 64, %s257, [#allocation6]
        $region20: #{tpu_custom_call.1} parent=11 // pred_fallthru
          _
        // Predicated region
        $region21: #{tpu_custom_call.1} parent=11 // pred_check
          %p260 = pneg %p113
        $region22: #{tpu_custom_call.1} parent=11 // pred_check_branch
          %262 = sbr.rel (%p260) target = $region24
        $region23: #{tpu_custom_call.1} parent=11 // pred_region
          %s264 = ssub.s32 256, 256
          %265 = vsyncadd [#allocation9], %s264
          %s266 = sshll.u32 [#allocation8], 4
          %s267 = int_to_ptr.vmem [resolvable:$true] %s266
          %272 = dma.hbm_to_vmem [thread:$0]  %s3, 256, %s267, [#allocation9], 64, 64, 4
        $region24: #{tpu_custom_call.1} parent=11 // pred_fallthru
          _
        // Predicated region
        $region25: #{tpu_custom_call.1} parent=11 // pred_check
          %p273 = pneg %p134
        $region26: #{tpu_custom_call.1} parent=11 // pred_check_branch
          %275 = sbr.rel (%p273) target = $region28
        $region27: #{tpu_custom_call.1} parent=11 // pred_region
          %s277 = ssub.s32 512, 512
          %278 = vsyncadd [#allocation9], %s277
          %s279 = sshll.u32 [#allocation10], 4
          %s280 = int_to_ptr.vmem [resolvable:$true] %s279
          %285 = dma.hbm_to_vmem [thread:$0]  %s4, 512, %s280, [#allocation9], 128, 128, 8
        $region28: #{tpu_custom_call.1} parent=11 // pred_fallthru
          _
        // Predicated region
        $region29: #{tpu_custom_call.1} parent=11 // pred_check
          %p286 = pneg %p155
        $region30: #{tpu_custom_call.1} parent=11 // pred_check_branch
          %288 = sbr.rel (%p286) target = $region32
        $region31: #{tpu_custom_call.1} parent=11 // pred_region
          %s290 = ssub.s32 512, 512
          %291 = vsyncadd [#allocation12], %s290
          %s292 = sshll.u32 [#allocation11], 4
          %s293 = int_to_ptr.vmem [resolvable:$true] %s292
          %298 = dma.hbm_to_vmem [thread:$0]  %s5, 512, %s293, [#allocation12], 128, 128, 8
        $region32: #{tpu_custom_call.1} parent=11 // pred_fallthru
          _
        // Predicated region
        $region33: #{tpu_custom_call.1} parent=11 // pred_check
          %p299 = pneg %p176
        $region34: #{tpu_custom_call.1} parent=11 // pred_check_branch
          %301 = sbr.rel (%p299) target = $region36
        $region35: #{tpu_custom_call.1} parent=11 // pred_region
          %s303 = ssub.s32 576, 576
          %304 = vsyncadd [#allocation12], %s303
          %s305 = sshll.u32 [#allocation13], 4
          %s306 = int_to_ptr.vmem [resolvable:$true] %s305
          %311 = dma.hbm_to_vmem [thread:$0]  %s6, 576, %s306, [#allocation12], 64, 64, 4
        $region36: #{tpu_custom_call.1} parent=11 // pred_fallthru
          _
        // Predicated region
        $region37: #{tpu_custom_call.1} parent=11 // pred_check
          %p312 = pneg %p197
        $region38: #{tpu_custom_call.1} parent=11 // pred_check_branch
          %314 = sbr.rel (%p312) target = $region40
        $region39: #{tpu_custom_call.1} parent=11 // pred_region
          %s316 = ssub.s32 288, 288
          %317 = vsyncadd [#allocation15], %s316
          %s318 = sshll.u32 [#allocation14], 4
          %s319 = int_to_ptr.vmem [resolvable:$true] %s318
          %324 = dma.hbm_to_vmem [thread:$0]  %s7, 288, %s319, [#allocation15], 32, 32, 2
        $region40: #{tpu_custom_call.1} parent=11 // pred_fallthru
          _
      $region12: #{tpu_custom_call.1} parent=5 // pred_fallthru
        _
      %p325 = scmp.lt.s32.totalorder %s24, 2
      // Predicated region
      $region41: #{tpu_custom_call.1} parent=5 // pred_check
        %p326 = pneg %p325
      $region42: #{tpu_custom_call.1} parent=5 // pred_check_branch
        %328 = sbr.rel (%p326) target = $region44
      $region43: #{tpu_custom_call.1} parent=5 // pred_region
        // Predicated region
        $region45: #{tpu_custom_call.1} parent=43 // pred_check
          %p329 = pneg %p44
        $region46: #{tpu_custom_call.1} parent=43 // pred_check_branch
          %331 = sbr.rel (%p329) target = $region48
        $region47: #{tpu_custom_call.1} parent=43 // pred_region
          %s332 = sand.u32 %s34, 1
          %s333 = scalar_lea.sflag [#allocation3], %s332
          %s334 = sand.u32 %s34, 1
          %s335 = smul.addr %s334, 8
          %s336 = scalar_lea.vmem [#allocation2], %s335
          %s338 = ssub.s32 128, 128
          %339 = vsyncadd %s333, %s338
          %s340 = smul.addr %s24, 2
          %s341 = smul.addr %s340, 64
          %s342 = scalar_lea.hbm %s0, %s341
          %s344 = sshll.u32 %s336, 4
          %s345 = int_to_ptr.vmem [resolvable:$true] %s344
          %347 = dma.hbm_to_vmem [thread:$0]  %s342, 128, %s345, %s333
        $region48: #{tpu_custom_call.1} parent=43 // pred_fallthru
          _
      $region44: #{tpu_custom_call.1} parent=5 // pred_fallthru
        _
      %p348 = scmp.le.s32.totalorder 1, %s24
      %p349 = scmp.lt.s32.totalorder %s24, 3
      %p350 = pnand %p348, %p349
      %p351 = pneg %p350
      // Predicated region
      $region49: #{tpu_custom_call.1} parent=5 // pred_check
        _
      $region50: #{tpu_custom_call.1} parent=5 // pred_check_branch
        %353 = sbr.rel (%p350) target = $region52
      $region51: #{tpu_custom_call.1} parent=5 // pred_region
        %s354 = ssub.s32 %s24, 1
        %s355 = sand.u32 %s37, 1
        %s356 = scalar_lea.sflag [#allocation3], %s355
        %s357 = sand.u32 %s37, 1
        %s358 = smul.addr %s357, 8
        %s359 = scalar_lea.vmem [#allocation2], %s358
        // Predicated region
        $region53: #{tpu_custom_call.1} parent=51 // pred_check
          %p360 = pneg %p50
        $region54: #{tpu_custom_call.1} parent=51 // pred_check_branch
          %362 = sbr.rel (%p360) target = $region56
        $region55: #{tpu_custom_call.1} parent=51 // pred_region
          %363 = dma.done %s356, 128
        $region56: #{tpu_custom_call.1} parent=51 // pred_fallthru
          _
        // Predicated region
        $region57: #{tpu_custom_call.1} parent=51 // pred_check
          %p364 = pneg %p71
        $region58: #{tpu_custom_call.1} parent=51 // pred_check_branch
          %366 = sbr.rel (%p364) target = $region60
        $region59: #{tpu_custom_call.1} parent=51 // pred_region
          %367 = dma.done [#allocation6], 64
        $region60: #{tpu_custom_call.1} parent=51 // pred_fallthru
          _
        // Predicated region
        $region61: #{tpu_custom_call.1} parent=51 // pred_check
          %p368 = pneg %p92
        $region62: #{tpu_custom_call.1} parent=51 // pred_check_branch
          %370 = sbr.rel (%p368) target = $region64
        $region63: #{tpu_custom_call.1} parent=51 // pred_region
          %371 = dma.done [#allocation6], 64
        $region64: #{tpu_custom_call.1} parent=51 // pred_fallthru
          _
        // Predicated region
        $region65: #{tpu_custom_call.1} parent=51 // pred_check
          %p372 = pneg %p113
        $region66: #{tpu_custom_call.1} parent=51 // pred_check_branch
          %374 = sbr.rel (%p372) target = $region68
        $region67: #{tpu_custom_call.1} parent=51 // pred_region
          %375 = dma.done [#allocation9], 256
        $region68: #{tpu_custom_call.1} parent=51 // pred_fallthru
          _
        // Predicated region
        $region69: #{tpu_custom_call.1} parent=51 // pred_check
          %p376 = pneg %p134
        $region70: #{tpu_custom_call.1} parent=51 // pred_check_branch
          %378 = sbr.rel (%p376) target = $region72
        $region71: #{tpu_custom_call.1} parent=51 // pred_region
          %379 = dma.done [#allocation9], 512
        $region72: #{tpu_custom_call.1} parent=51 // pred_fallthru
          _
        // Predicated region
        $region73: #{tpu_custom_call.1} parent=51 // pred_check
          %p380 = pneg %p155
        $region74: #{tpu_custom_call.1} parent=51 // pred_check_branch
          %382 = sbr.rel (%p380) target = $region76
        $region75: #{tpu_custom_call.1} parent=51 // pred_region
          %383 = dma.done [#allocation12], 512
        $region76: #{tpu_custom_call.1} parent=51 // pred_fallthru
          _
        // Predicated region
        $region77: #{tpu_custom_call.1} parent=51 // pred_check
          %p384 = pneg %p176
        $region78: #{tpu_custom_call.1} parent=51 // pred_check_branch
          %386 = sbr.rel (%p384) target = $region80
        $region79: #{tpu_custom_call.1} parent=51 // pred_region
          %387 = dma.done [#allocation12], 576
        $region80: #{tpu_custom_call.1} parent=51 // pred_fallthru
          _
        // Predicated region
        $region81: #{tpu_custom_call.1} parent=51 // pred_check
          %p388 = pneg %p197
        $region82: #{tpu_custom_call.1} parent=51 // pred_check_branch
          %390 = sbr.rel (%p388) target = $region84
        $region83: #{tpu_custom_call.1} parent=51 // pred_region
          %391 = dma.done [#allocation15], 288
        $region84: #{tpu_custom_call.1} parent=51 // pred_fallthru
          _
        %s392 = sand.u32 %s37, 1
        %s393 = scalar_lea.sflag [#allocation3], %s392
        %s394 = sand.u32 %s37, 1
        %s395 = smul.addr %s394, 8
        %s396 = scalar_lea.vmem [#allocation2], %s395
        %p397 = pneg %p50
        %p398 = pneg %p47
        %p399 = pneg %p71
        %p400 = pneg %p68
        %p401 = pneg %p92
        %p402 = pneg %p89
        %p403 = pneg %p113
        %p404 = pneg %p110
        %p405 = pneg %p134
        %p406 = pneg %p131
        %p407 = pneg %p155
        %p408 = pneg %p152
        %p409 = pneg %p176
        %p410 = pneg %p173
        %p411 = pneg %p197
        %p412 = pneg %p194
        %p413 = pneg %p223
        %p414 = pneg %p220
        %s415 = sand.u32 %s210, 1
        %s416 = scalar_lea.sflag [#allocation4], %s415
        %s417 = sand.u32 %s210, 1
        %s418 = smul.addr %s417, 32
        %s419 = scalar_lea.vmem [#allocation16], %s418
        %v421 = vld [vmem:[%s359] sm:$0xff]
        %v422 = vld [vmem:[#allocation5] sm:$0xf]
        %424 = vset.pattern.permute.xlu0 0
        %425 = vperm.xlu0 %424, %v422
        %v426 = vpop.permute.xlu0 %425
        %v428 = vunpack.c.l.s4 839922192
        %v429 = vunpack.c.0.s8 %v428
        %v430 = vlaneseq
        %v431 = vshrl.u32 %v430, 7
        %v432 = vsub.s32 %v429, %v431
        %v433 = vrot.slane %v426, %v432
        %v435 = vmul.f32 %v421, %v433
        %v436 = vld [vmem:[#allocation7] sm:$0xf]
        %438 = vset.pattern.permute.xlu0 0
        %439 = vperm.xlu0 %438, %v436
        %v440 = vpop.permute.xlu0 %439
        %v442 = vunpack.c.l.s4 839922192
        %v443 = vunpack.c.0.s8 %v442
        %v444 = vlaneseq
        %v445 = vshrl.u32 %v444, 7
        %v446 = vsub.s32 %v443, %v445
        %v447 = vrot.slane %v440, %v446
        %v449 = vadd.f32 %v435, %v447
        %v450 = vmax.f32 %v449, 0.0
        %v451 = vld [vmem:[#allocation8] sm:$0xf]
        %v452 = vld [vmem:[#allocation8 + $0x4] sm:$0xf]
        %v453 = vld [vmem:[#allocation8 + $0x8] sm:$0xf]
        %v454 = vld [vmem:[#allocation8 + $0xc] sm:$0xf]
        %v456 = vcombine.high %v450, %v450
        %v458 = vpack.c.bf16 %v450, %v450
        %v459 = vpack.c.bf16 %v456, %v456
        %v464 = vunpack.c.l.b16 %v451
        %v465 = vunpack.c.l.b16 %v452
        %v466 = vunpack.c.l.b16 %v453
        %v467 = vunpack.c.l.b16 %v454
        %v468 = vpack.c.b16 %v465, %v464
        %v469 = vpack.c.b16 %v467, %v466
        %vm470 = vcmask 31744
        %v472 = vsel %vm470, %v468, 0
        %v475 = vsel %vm470, %v469, 0
        %vm477 = vcmask 1041408
        %v479 = vsel %vm477, %v458, 0
        %v482 = vsel %vm477, %v459, 0
        %484 = vmatprep.subr.bf16.mxu0 %v482
        %485 = vmatpush1.bf16.msra.mxu0 %v479
        %486 = vmatprep.subr.bf16.mxu0 0
        %487 = vmatpush1.bf16.msra.mxu0 0
        %488 = vmatprep.subr.bf16.mxu0 0
        %489 = vmatpush1.bf16.msra.mxu0 0
        %490 = vmatprep.subr.bf16.mxu0 0
        %491 = vmatpush1.bf16.msra.mxu0 0
        %492 = vmatprep.subr.bf16.mxu0 0
        %493 = vmatpush1.bf16.msra.mxu0 0
        %494 = vmatprep.subr.bf16.mxu0 0
        %495 = vmatpush1.bf16.msra.mxu0 0
        %496 = vmatprep.subr.bf16.mxu0 0
        %497 = vmatpush1.bf16.msra.mxu0 0
        %498 = vmatprep.subr.bf16.mxu0 0
        %499 = vmatpush1.bf16.msra.mxu0 0
        %500 = vmatprep.subr.bf16.mxu0 0
        %501 = vmatpush1.bf16.msra.mxu0 0
        %502 = vmatprep.subr.bf16.mxu0 0
        %503 = vmatpush1.bf16.msra.mxu0 0
        %504 = vmatprep.subr.bf16.mxu0 0
        %505 = vmatpush1.bf16.msra.mxu0 0
        %506 = vmatprep.subr.bf16.mxu0 0
        %507 = vmatpush1.bf16.msra.mxu0 0
        %508 = vmatprep.subr.bf16.mxu0 0
        %509 = vmatpush1.bf16.msra.mxu0 0
        %510 = vmatprep.subr.bf16.mxu0 0
        %511 = vmatpush1.bf16.msra.mxu0 0
        %512 = vmatprep.subr.bf16.mxu0 0
        %513 = vmatpush1.bf16.msra.mxu0 0
        %514 = vmatprep.subr.bf16.mxu0 0
        %515 = vmatpush1.bf16.msra.mxu0 0
        %516 = vmatprep.mubr.bf16.mxu0 0
        %517 = vmatmul.mubr.bf16.gmra.mrb[0].mxu0 %v472
        %v518 = vpop.f32.mrb[0].mxu0
        %v519 = vadd.f32 0.0, %v518
        %v520 = vpop.f32.mrb[0].mxu0
        %v521 = vadd.f32 0.0, %v520
        %v522 = vpop.f32.mrb[0].mxu0
        %v523 = vadd.f32 0.0, %v522
        %v524 = vpop.f32.mrb[0].mxu0
        %v525 = vadd.f32 0.0, %v524
        %526 = vmatprep.mubr.bf16.mxu0 0
        %527 = vmatmul.mubr.bf16.gmra.mrb[0].mxu0 %v475
        %v528 = vpop.f32.mrb[0].mxu0
        %v529 = vadd.f32 0.0, %v528
        %v530 = vpop.f32.mrb[0].mxu0
        %v531 = vadd.f32 0.0, %v530
        %v532 = vpop.f32.mrb[0].mxu0
        %v533 = vadd.f32 0.0, %v532
        %v534 = vpop.f32.mrb[0].mxu0
        %v535 = vadd.f32 0.0, %v534
        %536 = vdwg.mxu0
        %v537 = vld [vmem:[#allocation10] sm:$0xff]
        %v538 = vld [vmem:[#allocation10 + $0x8] sm:$0xff]
        %v539 = vld [vmem:[#allocation10 + $0x10] sm:$0xff]
        %v540 = vld [vmem:[#allocation10 + $0x18] sm:$0xff]
        %542 = vset.pattern.permute.xlu0 0
        %543 = vperm.xlu0 %542, %v537
        %v544 = vpop.permute.xlu0 %543
        %547 = vset.pattern.permute.xlu0 0
        %548 = vperm.xlu0 %547, %v538
        %v549 = vpop.permute.xlu0 %548
        %552 = vset.pattern.permute.xlu0 0
        %553 = vperm.xlu0 %552, %v539
        %v554 = vpop.permute.xlu0 %553
        %557 = vset.pattern.permute.xlu0 0
        %558 = vperm.xlu0 %557, %v540
        %v559 = vpop.permute.xlu0 %558
        %v561 = vmul.f32 %v519, %v544
        %v562 = vmul.f32 %v521, %v544
        %v563 = vmul.f32 %v523, %v549
        %v564 = vmul.f32 %v525, %v549
        %v565 = vmul.f32 %v529, %v554
        %v566 = vmul.f32 %v531, %v554
        %v567 = vmul.f32 %v533, %v559
        %v568 = vmul.f32 %v535, %v559
        %v569 = vld [vmem:[#allocation11] sm:$0xff]
        %v570 = vld [vmem:[#allocation11 + $0x8] sm:$0xff]
        %v571 = vld [vmem:[#allocation11 + $0x10] sm:$0xff]
        %v572 = vld [vmem:[#allocation11 + $0x18] sm:$0xff]
        %574 = vset.pattern.permute.xlu0 0
        %575 = vperm.xlu0 %574, %v569
        %v576 = vpop.permute.xlu0 %575
        %579 = vset.pattern.permute.xlu0 0
        %580 = vperm.xlu0 %579, %v570
        %v581 = vpop.permute.xlu0 %580
        %584 = vset.pattern.permute.xlu0 0
        %585 = vperm.xlu0 %584, %v571
        %v586 = vpop.permute.xlu0 %585
        %589 = vset.pattern.permute.xlu0 0
        %590 = vperm.xlu0 %589, %v572
        %v591 = vpop.permute.xlu0 %590
        %v593 = vadd.f32 %v561, %v576
        %v594 = vadd.f32 %v562, %v576
        %v595 = vadd.f32 %v563, %v581
        %v596 = vadd.f32 %v564, %v581
        %v597 = vadd.f32 %v565, %v586
        %v598 = vadd.f32 %v566, %v586
        %v599 = vadd.f32 %v567, %v591
        %v600 = vadd.f32 %v568, %v591
        %v601 = vmax.f32 %v593, 0.0
        %v602 = vmax.f32 %v594, 0.0
        %v603 = vmax.f32 %v595, 0.0
        %v604 = vmax.f32 %v596, 0.0
        %v605 = vmax.f32 %v597, 0.0
        %v606 = vmax.f32 %v598, 0.0
        %v607 = vmax.f32 %v599, 0.0
        %v608 = vmax.f32 %v600, 0.0
        %609 = vrot.lane.b32.xlu0 %v601, 17
        %v610 = vpop.permute.xlu0 %609
        %611 = vrot.lane.b32.xlu0 %v603, 17
        %v612 = vpop.permute.xlu0 %611
        %613 = vrot.lane.b32.xlu0 %v605, 17
        %v614 = vpop.permute.xlu0 %613
        %615 = vrot.lane.b32.xlu0 %v607, 17
        %v616 = vpop.permute.xlu0 %615
        %617 = vrot.lane.b32.xlu0 %v602, 17
        %v618 = vpop.permute.xlu0 %617
        %619 = vrot.lane.b32.xlu0 %v604, 17
        %v620 = vpop.permute.xlu0 %619
        %621 = vrot.lane.b32.xlu0 %v606, 17
        %v622 = vpop.permute.xlu0 %621
        %623 = vrot.lane.b32.xlu0 %v608, 17
        %v624 = vpop.permute.xlu0 %623
        %v625 = vlaneseq
        %v626 = vand.u32 %v625, 127
        %vm627 = vcmp.lt.s32.totalorder %v626, 17
        %v628 = vsel %vm627, %v610, %v618
        %v629 = vsel %vm627, %v612, %v620
        %v630 = vsel %vm627, %v614, %v622
        %v631 = vsel %vm627, %v616, %v624
        %v632 = vsel %vm627, %v618, %v610
        %v633 = vsel %vm627, %v620, %v612
        %v634 = vsel %vm627, %v622, %v614
        %v635 = vsel %vm627, %v624, %v616
        %v636 = vld [vmem:[#allocation14] sm:$0x3]
        %v638 = vlaneseq
        %v639 = vshrl.u32 %v638, 7
        %v640 = vsub.s32 0, %v639
        %v641 = vrot.slane %v636, %v640
        %v642 = vlaneseq
        %v643 = vshrl.u32 %v642, 7
        %v644 = vsub.s32 1, %v643
        %v645 = vrot.slane %v636, %v644
        %v648 = vmul.f32 %v632, %v641
        %v649 = vmul.f32 %v628, %v645
        %v650 = vmul.f32 %v633, %v641
        %v651 = vmul.f32 %v629, %v645
        %v652 = vmul.f32 %v634, %v641
        %v653 = vmul.f32 %v630, %v645
        %v654 = vmul.f32 %v635, %v641
        %v655 = vmul.f32 %v631, %v645
        %v656 = vpack.c.bf16 %v650, %v648
        %v657 = vpack.c.bf16 %v651, %v649
        %v658 = vpack.c.bf16 %v654, %v652
        %v659 = vpack.c.bf16 %v655, %v653
        %v660 = vld [vmem:[#allocation13] sm:$0xf]
        %661 = vrot.lane.b32.xlu0 %v601, 16
        %v662 = vpop.permute.xlu0 %661
        %663 = vrot.lane.b32.xlu0 %v603, 16
        %v664 = vpop.permute.xlu0 %663
        %665 = vrot.lane.b32.xlu0 %v605, 16
        %v666 = vpop.permute.xlu0 %665
        %667 = vrot.lane.b32.xlu0 %v607, 16
        %v668 = vpop.permute.xlu0 %667
        %669 = vrot.lane.b32.xlu0 %v602, 16
        %v670 = vpop.permute.xlu0 %669
        %671 = vrot.lane.b32.xlu0 %v604, 16
        %v672 = vpop.permute.xlu0 %671
        %673 = vrot.lane.b32.xlu0 %v606, 16
        %v674 = vpop.permute.xlu0 %673
        %675 = vrot.lane.b32.xlu0 %v608, 16
        %v676 = vpop.permute.xlu0 %675
        %vm677 = vcmp.lt.s32.totalorder %v626, 16
        %v678 = vsel %vm677, %v662, %v670
        %v679 = vsel %vm677, %v664, %v672
        %v680 = vsel %vm677, %v666, %v674
        %v681 = vsel %vm677, %v668, %v676
        %v682 = vsel %vm677, %v670, %v662
        %v683 = vsel %vm677, %v672, %v664
        %v684 = vsel %vm677, %v674, %v666
        %v685 = vsel %vm677, %v676, %v668
        %s686 = scalar_lea.vmem [#allocation14], 2
        %v687 = vld [vmem:[%s686] sm:$0x3]
        %v689 = vlaneseq
        %v690 = vshrl.u32 %v689, 7
        %v691 = vsub.s32 0, %v690
        %v692 = vrot.slane %v687, %v691
        %v693 = vlaneseq
        %v694 = vshrl.u32 %v693, 7
        %v695 = vsub.s32 1, %v694
        %v696 = vrot.slane %v687, %v695
        %v699 = vmul.f32 %v682, %v692
        %v700 = vmul.f32 %v678, %v696
        %v701 = vmul.f32 %v683, %v692
        %v702 = vmul.f32 %v679, %v696
        %v703 = vmul.f32 %v684, %v692
        %v704 = vmul.f32 %v680, %v696
        %v705 = vmul.f32 %v685, %v692
        %v706 = vmul.f32 %v681, %v696
        %v707 = vpack.c.bf16 %v701, %v699
        %v708 = vpack.c.bf16 %v702, %v700
        %v709 = vpack.c.bf16 %v705, %v703
        %v710 = vpack.c.bf16 %v706, %v704
        %s711 = scalar_lea.vmem [#allocation13], 4
        %v712 = vld [vmem:[%s711] sm:$0xf]
        %vm713 = vcmask 261120
        %v715 = vsel %vm713, %v712, 0
        %717 = vmatprep.subr.bf16.mxu0 %v708
        %718 = vmatpush1.bf16.msra.mxu0 %v707
        %719 = vmatprep.subr.bf16.mxu0 %v710
        %720 = vmatpush1.bf16.msra.mxu0 %v709
        %721 = vmatprep.subr.bf16.mxu0 0
        %722 = vmatpush1.bf16.msra.mxu0 0
        %723 = vmatprep.subr.bf16.mxu0 0
        %724 = vmatpush1.bf16.msra.mxu0 0
        %725 = vmatprep.subr.bf16.mxu0 0
        %726 = vmatpush1.bf16.msra.mxu0 0
        %727 = vmatprep.subr.bf16.mxu0 0
        %728 = vmatpush1.bf16.msra.mxu0 0
        %729 = vmatprep.subr.bf16.mxu0 0
        %730 = vmatpush1.bf16.msra.mxu0 0
        %731 = vmatprep.subr.bf16.mxu0 0
        %732 = vmatpush1.bf16.msra.mxu0 0
        %733 = vmatprep.subr.bf16.mxu0 0
        %734 = vmatpush1.bf16.msra.mxu0 0
        %735 = vmatprep.subr.bf16.mxu0 0
        %736 = vmatpush1.bf16.msra.mxu0 0
        %737 = vmatprep.subr.bf16.mxu0 0
        %738 = vmatpush1.bf16.msra.mxu0 0
        %739 = vmatprep.subr.bf16.mxu0 0
        %740 = vmatpush1.bf16.msra.mxu0 0
        %741 = vmatprep.subr.bf16.mxu0 0
        %742 = vmatpush1.bf16.msra.mxu0 0
        %743 = vmatprep.subr.bf16.mxu0 0
        %744 = vmatpush1.bf16.msra.mxu0 0
        %745 = vmatprep.subr.bf16.mxu0 0
        %746 = vmatpush1.bf16.msra.mxu0 0
        %747 = vmatprep.subr.bf16.mxu0 0
        %748 = vmatpush1.bf16.msra.mxu0 0
        %749 = vmatprep.mubr.bf16.mxu0 0
        %750 = vmatmul.mubr.bf16.gmra.mrb[0].mxu0 %v715
        %v751 = vpop.f32.mrb[0].mxu0
        %v752 = vadd.f32 0.0, %v751
        %v753 = vpop.f32.mrb[0].mxu0
        %v754 = vadd.f32 0.0, %v753
        %v755 = vpop.f32.mrb[0].mxu0
        %v756 = vpop.f32.mrb[0].mxu0
        %757 = vdwg.mxu0
        %v759 = vsel %vm713, %v660, 0
        %761 = vmatprep.subr.bf16.mxu0 %v657
        %762 = vmatpush1.bf16.msra.mxu0 %v656
        %763 = vmatprep.subr.bf16.mxu0 %v659
        %764 = vmatpush1.bf16.msra.mxu0 %v658
        %765 = vmatprep.subr.bf16.mxu0 0
        %766 = vmatpush1.bf16.msra.mxu0 0
        %767 = vmatprep.subr.bf16.mxu0 0
        %768 = vmatpush1.bf16.msra.mxu0 0
        %769 = vmatprep.subr.bf16.mxu0 0
        %770 = vmatpush1.bf16.msra.mxu0 0
        %771 = vmatprep.subr.bf16.mxu0 0
        %772 = vmatpush1.bf16.msra.mxu0 0
        %773 = vmatprep.subr.bf16.mxu0 0
        %774 = vmatpush1.bf16.msra.mxu0 0
        %775 = vmatprep.subr.bf16.mxu0 0
        %776 = vmatpush1.bf16.msra.mxu0 0
        %777 = vmatprep.subr.bf16.mxu0 0
        %778 = vmatpush1.bf16.msra.mxu0 0
        %779 = vmatprep.subr.bf16.mxu0 0
        %780 = vmatpush1.bf16.msra.mxu0 0
        %781 = vmatprep.subr.bf16.mxu0 0
        %782 = vmatpush1.bf16.msra.mxu0 0
        %783 = vmatprep.subr.bf16.mxu0 0
        %784 = vmatpush1.bf16.msra.mxu0 0
        %785 = vmatprep.subr.bf16.mxu0 0
        %786 = vmatpush1.bf16.msra.mxu0 0
        %787 = vmatprep.subr.bf16.mxu0 0
        %788 = vmatpush1.bf16.msra.mxu0 0
        %789 = vmatprep.subr.bf16.mxu0 0
        %790 = vmatpush1.bf16.msra.mxu0 0
        %791 = vmatprep.subr.bf16.mxu0 0
        %792 = vmatpush1.bf16.msra.mxu0 0
        %793 = vmatprep.mubr.bf16.mxu0 0
        %794 = vmatmul.mubr.bf16.gmra.mrb[0].mxu0 %v759
        %v795 = vpop.f32.mrb[0].mxu0
        %v796 = vadd.f32 %v752, %v795
        %v797 = vpop.f32.mrb[0].mxu0
        %v798 = vadd.f32 %v754, %v797
        %v799 = vpop.f32.mrb[0].mxu0
        %v800 = vpop.f32.mrb[0].mxu0
        %801 = vdwg.mxu0
        %802 = vrot.lane.b32.xlu0 %v601, 15
        %v803 = vpop.permute.xlu0 %802
        %804 = vrot.lane.b32.xlu0 %v603, 15
        %v805 = vpop.permute.xlu0 %804
        %806 = vrot.lane.b32.xlu0 %v605, 15
        %v807 = vpop.permute.xlu0 %806
        %808 = vrot.lane.b32.xlu0 %v607, 15
        %v809 = vpop.permute.xlu0 %808
        %810 = vrot.lane.b32.xlu0 %v602, 15
        %v811 = vpop.permute.xlu0 %810
        %812 = vrot.lane.b32.xlu0 %v604, 15
        %v813 = vpop.permute.xlu0 %812
        %814 = vrot.lane.b32.xlu0 %v606, 15
        %v815 = vpop.permute.xlu0 %814
        %816 = vrot.lane.b32.xlu0 %v608, 15
        %v817 = vpop.permute.xlu0 %816
        %vm818 = vcmp.lt.s32.totalorder %v626, 15
        %v819 = vsel %vm818, %v803, %v811
        %v820 = vsel %vm818, %v805, %v813
        %v821 = vsel %vm818, %v807, %v815
        %v822 = vsel %vm818, %v809, %v817
        %v823 = vsel %vm818, %v811, %v803
        %v824 = vsel %vm818, %v813, %v805
        %v825 = vsel %vm818, %v815, %v807
        %v826 = vsel %vm818, %v817, %v809
        %s827 = scalar_lea.vmem [#allocation14], 4
        %v828 = vld [vmem:[%s827] sm:$0x3]
        %v830 = vlaneseq
        %v831 = vshrl.u32 %v830, 7
        %v832 = vsub.s32 0, %v831
        %v833 = vrot.slane %v828, %v832
        %v834 = vlaneseq
        %v835 = vshrl.u32 %v834, 7
        %v836 = vsub.s32 1, %v835
        %v837 = vrot.slane %v828, %v836
        %v840 = vmul.f32 %v823, %v833
        %v841 = vmul.f32 %v819, %v837
        %v842 = vmul.f32 %v824, %v833
        %v843 = vmul.f32 %v820, %v837
        %v844 = vmul.f32 %v825, %v833
        %v845 = vmul.f32 %v821, %v837
        %v846 = vmul.f32 %v826, %v833
        %v847 = vmul.f32 %v822, %v837
        %v848 = vpack.c.bf16 %v842, %v840
        %v849 = vpack.c.bf16 %v843, %v841
        %v850 = vpack.c.bf16 %v846, %v844
        %v851 = vpack.c.bf16 %v847, %v845
        %s852 = scalar_lea.vmem [#allocation13], 8
        %v853 = vld [vmem:[%s852] sm:$0xf]
        %v855 = vsel %vm713, %v853, 0
        %857 = vmatprep.subr.bf16.mxu0 %v849
        %858 = vmatpush1.bf16.msra.mxu0 %v848
        %859 = vmatprep.subr.bf16.mxu0 %v851
        %860 = vmatpush1.bf16.msra.mxu0 %v850
        %861 = vmatprep.subr.bf16.mxu0 0
        %862 = vmatpush1.bf16.msra.mxu0 0
        %863 = vmatprep.subr.bf16.mxu0 0
        %864 = vmatpush1.bf16.msra.mxu0 0
        %865 = vmatprep.subr.bf16.mxu0 0
        %866 = vmatpush1.bf16.msra.mxu0 0
        %867 = vmatprep.subr.bf16.mxu0 0
        %868 = vmatpush1.bf16.msra.mxu0 0
        %869 = vmatprep.subr.bf16.mxu0 0
        %870 = vmatpush1.bf16.msra.mxu0 0
        %871 = vmatprep.subr.bf16.mxu0 0
        %872 = vmatpush1.bf16.msra.mxu0 0
        %873 = vmatprep.subr.bf16.mxu0 0
        %874 = vmatpush1.bf16.msra.mxu0 0
        %875 = vmatprep.subr.bf16.mxu0 0
        %876 = vmatpush1.bf16.msra.mxu0 0
        %877 = vmatprep.subr.bf16.mxu0 0
        %878 = vmatpush1.bf16.msra.mxu0 0
        %879 = vmatprep.subr.bf16.mxu0 0
        %880 = vmatpush1.bf16.msra.mxu0 0
        %881 = vmatprep.subr.bf16.mxu0 0
        %882 = vmatpush1.bf16.msra.mxu0 0
        %883 = vmatprep.subr.bf16.mxu0 0
        %884 = vmatpush1.bf16.msra.mxu0 0
        %885 = vmatprep.subr.bf16.mxu0 0
        %886 = vmatpush1.bf16.msra.mxu0 0
        %887 = vmatprep.subr.bf16.mxu0 0
        %888 = vmatpush1.bf16.msra.mxu0 0
        %889 = vmatprep.mubr.bf16.mxu0 0
        %890 = vmatmul.mubr.bf16.gmra.mrb[0].mxu0 %v855
        %v891 = vpop.f32.mrb[0].mxu0
        %v892 = vadd.f32 0.0, %v891
        %v893 = vpop.f32.mrb[0].mxu0
        %v894 = vadd.f32 0.0, %v893
        %v895 = vpop.f32.mrb[0].mxu0
        %v896 = vpop.f32.mrb[0].mxu0
        %897 = vdwg.mxu0
        %v898 = vadd.f32 %v796, %v892
        %v899 = vadd.f32 %v798, %v894
        %900 = vrot.lane.b32.xlu0 %v601, 1
        %v901 = vpop.permute.xlu0 %900
        %902 = vrot.lane.b32.xlu0 %v603, 1
        %v903 = vpop.permute.xlu0 %902
        %904 = vrot.lane.b32.xlu0 %v605, 1
        %v905 = vpop.permute.xlu0 %904
        %906 = vrot.lane.b32.xlu0 %v607, 1
        %v907 = vpop.permute.xlu0 %906
        %908 = vrot.lane.b32.xlu0 %v602, 1
        %v909 = vpop.permute.xlu0 %908
        %910 = vrot.lane.b32.xlu0 %v604, 1
        %v911 = vpop.permute.xlu0 %910
        %912 = vrot.lane.b32.xlu0 %v606, 1
        %v913 = vpop.permute.xlu0 %912
        %914 = vrot.lane.b32.xlu0 %v608, 1
        %v915 = vpop.permute.xlu0 %914
        %vm916 = vcmp.lt.s32.totalorder %v626, 1
        %v917 = vsel %vm916, %v901, %v909
        %v918 = vsel %vm916, %v903, %v911
        %v919 = vsel %vm916, %v905, %v913
        %v920 = vsel %vm916, %v907, %v915
        %v921 = vsel %vm916, %v909, %v901
        %v922 = vsel %vm916, %v911, %v903
        %v923 = vsel %vm916, %v913, %v905
        %v924 = vsel %vm916, %v915, %v907
        %s925 = scalar_lea.vmem [#allocation14], 6
        %v926 = vld [vmem:[%s925] sm:$0x3]
        %v928 = vlaneseq
        %v929 = vshrl.u32 %v928, 7
        %v930 = vsub.s32 0, %v929
        %v931 = vrot.slane %v926, %v930
        %v932 = vlaneseq
        %v933 = vshrl.u32 %v932, 7
        %v934 = vsub.s32 1, %v933
        %v935 = vrot.slane %v926, %v934
        %v938 = vmul.f32 %v921, %v931
        %v939 = vmul.f32 %v917, %v935
        %v940 = vmul.f32 %v922, %v931
        %v941 = vmul.f32 %v918, %v935
        %v942 = vmul.f32 %v923, %v931
        %v943 = vmul.f32 %v919, %v935
        %v944 = vmul.f32 %v924, %v931
        %v945 = vmul.f32 %v920, %v935
        %v946 = vpack.c.bf16 %v940, %v938
        %v947 = vpack.c.bf16 %v941, %v939
        %v948 = vpack.c.bf16 %v944, %v942
        %v949 = vpack.c.bf16 %v945, %v943
        %s950 = scalar_lea.vmem [#allocation13], 12
        %v951 = vld [vmem:[%s950] sm:$0xf]
        %v953 = vsel %vm713, %v951, 0
        %955 = vmatprep.subr.bf16.mxu0 %v947
        %956 = vmatpush1.bf16.msra.mxu0 %v946
        %957 = vmatprep.subr.bf16.mxu0 %v949
        %958 = vmatpush1.bf16.msra.mxu0 %v948
        %959 = vmatprep.subr.bf16.mxu0 0
        %960 = vmatpush1.bf16.msra.mxu0 0
        %961 = vmatprep.subr.bf16.mxu0 0
        %962 = vmatpush1.bf16.msra.mxu0 0
        %963 = vmatprep.subr.bf16.mxu0 0
        %964 = vmatpush1.bf16.msra.mxu0 0
        %965 = vmatprep.subr.bf16.mxu0 0
        %966 = vmatpush1.bf16.msra.mxu0 0
        %967 = vmatprep.subr.bf16.mxu0 0
        %968 = vmatpush1.bf16.msra.mxu0 0
        %969 = vmatprep.subr.bf16.mxu0 0
        %970 = vmatpush1.bf16.msra.mxu0 0
        %971 = vmatprep.subr.bf16.mxu0 0
        %972 = vmatpush1.bf16.msra.mxu0 0
        %973 = vmatprep.subr.bf16.mxu0 0
        %974 = vmatpush1.bf16.msra.mxu0 0
        %975 = vmatprep.subr.bf16.mxu0 0
        %976 = vmatpush1.bf16.msra.mxu0 0
        %977 = vmatprep.subr.bf16.mxu0 0
        %978 = vmatpush1.bf16.msra.mxu0 0
        %979 = vmatprep.subr.bf16.mxu0 0
        %980 = vmatpush1.bf16.msra.mxu0 0
        %981 = vmatprep.subr.bf16.mxu0 0
        %982 = vmatpush1.bf16.msra.mxu0 0
        %983 = vmatprep.subr.bf16.mxu0 0
        %984 = vmatpush1.bf16.msra.mxu0 0
        %985 = vmatprep.subr.bf16.mxu0 0
        %986 = vmatpush1.bf16.msra.mxu0 0
        %987 = vmatprep.mubr.bf16.mxu0 0
        %988 = vmatmul.mubr.bf16.gmra.mrb[0].mxu0 %v953
        %v989 = vpop.f32.mrb[0].mxu0
        %v990 = vadd.f32 0.0, %v989
        %v991 = vpop.f32.mrb[0].mxu0
        %v992 = vadd.f32 0.0, %v991
        %v993 = vpop.f32.mrb[0].mxu0
        %v994 = vpop.f32.mrb[0].mxu0
        %995 = vdwg.mxu0
        %v996 = vadd.f32 %v898, %v990
        %v997 = vadd.f32 %v899, %v992
        %s998 = scalar_lea.vmem [#allocation14], 8
        %v999 = vld [vmem:[%s998] sm:$0x3]
        %v1001 = vlaneseq
        %v1002 = vshrl.u32 %v1001, 7
        %v1003 = vsub.s32 0, %v1002
        %v1004 = vrot.slane %v999, %v1003
        %v1005 = vlaneseq
        %v1006 = vshrl.u32 %v1005, 7
        %v1007 = vsub.s32 1, %v1006
        %v1008 = vrot.slane %v999, %v1007
        %v1011 = vmul.f32 %v601, %v1004
        %v1012 = vmul.f32 %v602, %v1008
        %v1013 = vmul.f32 %v603, %v1004
        %v1014 = vmul.f32 %v604, %v1008
        %v1015 = vmul.f32 %v605, %v1004
        %v1016 = vmul.f32 %v606, %v1008
        %v1017 = vmul.f32 %v607, %v1004
        %v1018 = vmul.f32 %v608, %v1008
        %v1019 = vpack.c.bf16 %v1013, %v1011
        %v1020 = vpack.c.bf16 %v1014, %v1012
        %v1021 = vpack.c.bf16 %v1017, %v1015
        %v1022 = vpack.c.bf16 %v1018, %v1016
        %s1023 = scalar_lea.vmem [#allocation13], 16
        %v1024 = vld [vmem:[%s1023] sm:$0xf]
        %v1026 = vsel %vm713, %v1024, 0
        %1028 = vmatprep.subr.bf16.mxu0 %v1020
        %1029 = vmatpush1.bf16.msra.mxu0 %v1019
        %1030 = vmatprep.subr.bf16.mxu0 %v1022
        %1031 = vmatpush1.bf16.msra.mxu0 %v1021
        %1032 = vmatprep.subr.bf16.mxu0 0
        %1033 = vmatpush1.bf16.msra.mxu0 0
        %1034 = vmatprep.subr.bf16.mxu0 0
        %1035 = vmatpush1.bf16.msra.mxu0 0
        %1036 = vmatprep.subr.bf16.mxu0 0
        %1037 = vmatpush1.bf16.msra.mxu0 0
        %1038 = vmatprep.subr.bf16.mxu0 0
        %1039 = vmatpush1.bf16.msra.mxu0 0
        %1040 = vmatprep.subr.bf16.mxu0 0
        %1041 = vmatpush1.bf16.msra.mxu0 0
        %1042 = vmatprep.subr.bf16.mxu0 0
        %1043 = vmatpush1.bf16.msra.mxu0 0
        %1044 = vmatprep.subr.bf16.mxu0 0
        %1045 = vmatpush1.bf16.msra.mxu0 0
        %1046 = vmatprep.subr.bf16.mxu0 0
        %1047 = vmatpush1.bf16.msra.mxu0 0
        %1048 = vmatprep.subr.bf16.mxu0 0
        %1049 = vmatpush1.bf16.msra.mxu0 0
        %1050 = vmatprep.subr.bf16.mxu0 0
        %1051 = vmatpush1.bf16.msra.mxu0 0
        %1052 = vmatprep.subr.bf16.mxu0 0
        %1053 = vmatpush1.bf16.msra.mxu0 0
        %1054 = vmatprep.subr.bf16.mxu0 0
        %1055 = vmatpush1.bf16.msra.mxu0 0
        %1056 = vmatprep.subr.bf16.mxu0 0
        %1057 = vmatpush1.bf16.msra.mxu0 0
        %1058 = vmatprep.subr.bf16.mxu0 0
        %1059 = vmatpush1.bf16.msra.mxu0 0
        %1060 = vmatprep.mubr.bf16.mxu0 0
        %1061 = vmatmul.mubr.bf16.gmra.mrb[0].mxu0 %v1026
        %v1062 = vpop.f32.mrb[0].mxu0
        %v1063 = vadd.f32 0.0, %v1062
        %v1064 = vpop.f32.mrb[0].mxu0
        %v1065 = vadd.f32 0.0, %v1064
        %v1066 = vpop.f32.mrb[0].mxu0
        %v1067 = vpop.f32.mrb[0].mxu0
        %1068 = vdwg.mxu0
        %v1069 = vadd.f32 %v996, %v1063
        %v1070 = vadd.f32 %v997, %v1065
        %1071 = vrot.lane.b32.xlu0 %v601, 127
        %v1072 = vpop.permute.xlu0 %1071
        %1073 = vrot.lane.b32.xlu0 %v603, 127
        %v1074 = vpop.permute.xlu0 %1073
        %1075 = vrot.lane.b32.xlu0 %v605, 127
        %v1076 = vpop.permute.xlu0 %1075
        %1077 = vrot.lane.b32.xlu0 %v607, 127
        %v1078 = vpop.permute.xlu0 %1077
        %1079 = vrot.lane.b32.xlu0 %v602, 127
        %v1080 = vpop.permute.xlu0 %1079
        %1081 = vrot.lane.b32.xlu0 %v604, 127
        %v1082 = vpop.permute.xlu0 %1081
        %1083 = vrot.lane.b32.xlu0 %v606, 127
        %v1084 = vpop.permute.xlu0 %1083
        %1085 = vrot.lane.b32.xlu0 %v608, 127
        %v1086 = vpop.permute.xlu0 %1085
        %vm1087 = vcmp.lt.s32.totalorder %v626, 127
        %v1088 = vsel %vm1087, %v1072, %v1080
        %v1089 = vsel %vm1087, %v1074, %v1082
        %v1090 = vsel %vm1087, %v1076, %v1084
        %v1091 = vsel %vm1087, %v1078, %v1086
        %v1092 = vsel %vm1087, %v1080, %v1072
        %v1093 = vsel %vm1087, %v1082, %v1074
        %v1094 = vsel %vm1087, %v1084, %v1076
        %v1095 = vsel %vm1087, %v1086, %v1078
        %s1096 = scalar_lea.vmem [#allocation14], 10
        %v1097 = vld [vmem:[%s1096] sm:$0x3]
        %v1099 = vlaneseq
        %v1100 = vshrl.u32 %v1099, 7
        %v1101 = vsub.s32 0, %v1100
        %v1102 = vrot.slane %v1097, %v1101
        %v1103 = vlaneseq
        %v1104 = vshrl.u32 %v1103, 7
        %v1105 = vsub.s32 1, %v1104
        %v1106 = vrot.slane %v1097, %v1105
        %v1109 = vmul.f32 %v1088, %v1102
        %v1110 = vmul.f32 %v1092, %v1106
        %v1111 = vmul.f32 %v1089, %v1102
        %v1112 = vmul.f32 %v1093, %v1106
        %v1113 = vmul.f32 %v1090, %v1102
        %v1114 = vmul.f32 %v1094, %v1106
        %v1115 = vmul.f32 %v1091, %v1102
        %v1116 = vmul.f32 %v1095, %v1106
        %v1117 = vpack.c.bf16 %v1111, %v1109
        %v1118 = vpack.c.bf16 %v1112, %v1110
        %v1119 = vpack.c.bf16 %v1115, %v1113
        %v1120 = vpack.c.bf16 %v1116, %v1114
        %s1121 = scalar_lea.vmem [#allocation13], 20
        %v1122 = vld [vmem:[%s1121] sm:$0xf]
        %v1124 = vsel %vm713, %v1122, 0
        %1126 = vmatprep.subr.bf16.mxu0 %v1118
        %1127 = vmatpush1.bf16.msra.mxu0 %v1117
        %1128 = vmatprep.subr.bf16.mxu0 %v1120
        %1129 = vmatpush1.bf16.msra.mxu0 %v1119
        %1130 = vmatprep.subr.bf16.mxu0 0
        %1131 = vmatpush1.bf16.msra.mxu0 0
        %1132 = vmatprep.subr.bf16.mxu0 0
        %1133 = vmatpush1.bf16.msra.mxu0 0
        %1134 = vmatprep.subr.bf16.mxu0 0
        %1135 = vmatpush1.bf16.msra.mxu0 0
        %1136 = vmatprep.subr.bf16.mxu0 0
        %1137 = vmatpush1.bf16.msra.mxu0 0
        %1138 = vmatprep.subr.bf16.mxu0 0
        %1139 = vmatpush1.bf16.msra.mxu0 0
        %1140 = vmatprep.subr.bf16.mxu0 0
        %1141 = vmatpush1.bf16.msra.mxu0 0
        %1142 = vmatprep.subr.bf16.mxu0 0
        %1143 = vmatpush1.bf16.msra.mxu0 0
        %1144 = vmatprep.subr.bf16.mxu0 0
        %1145 = vmatpush1.bf16.msra.mxu0 0
        %1146 = vmatprep.subr.bf16.mxu0 0
        %1147 = vmatpush1.bf16.msra.mxu0 0
        %1148 = vmatprep.subr.bf16.mxu0 0
        %1149 = vmatpush1.bf16.msra.mxu0 0
        %1150 = vmatprep.subr.bf16.mxu0 0
        %1151 = vmatpush1.bf16.msra.mxu0 0
        %1152 = vmatprep.subr.bf16.mxu0 0
        %1153 = vmatpush1.bf16.msra.mxu0 0
        %1154 = vmatprep.subr.bf16.mxu0 0
        %1155 = vmatpush1.bf16.msra.mxu0 0
        %1156 = vmatprep.subr.bf16.mxu0 0
        %1157 = vmatpush1.bf16.msra.mxu0 0
        %1158 = vmatprep.mubr.bf16.mxu0 0
        %1159 = vmatmul.mubr.bf16.gmra.mrb[0].mxu0 %v1124
        %v1160 = vpop.f32.mrb[0].mxu0
        %v1161 = vadd.f32 0.0, %v1160
        %v1162 = vpop.f32.mrb[0].mxu0
        %v1163 = vadd.f32 0.0, %v1162
        %v1164 = vpop.f32.mrb[0].mxu0
        %v1165 = vpop.f32.mrb[0].mxu0
        %1166 = vdwg.mxu0
        %v1167 = vadd.f32 %v1069, %v1161
        %v1168 = vadd.f32 %v1070, %v1163
        %1169 = vrot.lane.b32.xlu0 %v601, 113
        %v1170 = vpop.permute.xlu0 %1169
        %1171 = vrot.lane.b32.xlu0 %v603, 113
        %v1172 = vpop.permute.xlu0 %1171
        %1173 = vrot.lane.b32.xlu0 %v605, 113
        %v1174 = vpop.permute.xlu0 %1173
        %1175 = vrot.lane.b32.xlu0 %v607, 113
        %v1176 = vpop.permute.xlu0 %1175
        %1177 = vrot.lane.b32.xlu0 %v602, 113
        %v1178 = vpop.permute.xlu0 %1177
        %1179 = vrot.lane.b32.xlu0 %v604, 113
        %v1180 = vpop.permute.xlu0 %1179
        %1181 = vrot.lane.b32.xlu0 %v606, 113
        %v1182 = vpop.permute.xlu0 %1181
        %1183 = vrot.lane.b32.xlu0 %v608, 113
        %v1184 = vpop.permute.xlu0 %1183
        %vm1185 = vcmp.lt.s32.totalorder %v626, 113
        %v1186 = vsel %vm1185, %v1170, %v1178
        %v1187 = vsel %vm1185, %v1172, %v1180
        %v1188 = vsel %vm1185, %v1174, %v1182
        %v1189 = vsel %vm1185, %v1176, %v1184
        %v1190 = vsel %vm1185, %v1178, %v1170
        %v1191 = vsel %vm1185, %v1180, %v1172
        %v1192 = vsel %vm1185, %v1182, %v1174
        %v1193 = vsel %vm1185, %v1184, %v1176
        %s1194 = scalar_lea.vmem [#allocation14], 12
        %v1195 = vld [vmem:[%s1194] sm:$0x3]
        %v1197 = vlaneseq
        %v1198 = vshrl.u32 %v1197, 7
        %v1199 = vsub.s32 0, %v1198
        %v1200 = vrot.slane %v1195, %v1199
        %v1201 = vlaneseq
        %v1202 = vshrl.u32 %v1201, 7
        %v1203 = vsub.s32 1, %v1202
        %v1204 = vrot.slane %v1195, %v1203
        %v1207 = vmul.f32 %v1186, %v1200
        %v1208 = vmul.f32 %v1190, %v1204
        %v1209 = vmul.f32 %v1187, %v1200
        %v1210 = vmul.f32 %v1191, %v1204
        %v1211 = vmul.f32 %v1188, %v1200
        %v1212 = vmul.f32 %v1192, %v1204
        %v1213 = vmul.f32 %v1189, %v1200
        %v1214 = vmul.f32 %v1193, %v1204
        %v1215 = vpack.c.bf16 %v1209, %v1207
        %v1216 = vpack.c.bf16 %v1210, %v1208
        %v1217 = vpack.c.bf16 %v1213, %v1211
        %v1218 = vpack.c.bf16 %v1214, %v1212
        %s1219 = scalar_lea.vmem [#allocation13], 24
        %v1220 = vld [vmem:[%s1219] sm:$0xf]
        %v1222 = vsel %vm713, %v1220, 0
        %1224 = vmatprep.subr.bf16.mxu0 %v1216
        %1225 = vmatpush1.bf16.msra.mxu0 %v1215
        %1226 = vmatprep.subr.bf16.mxu0 %v1218
        %1227 = vmatpush1.bf16.msra.mxu0 %v1217
        %1228 = vmatprep.subr.bf16.mxu0 0
        %1229 = vmatpush1.bf16.msra.mxu0 0
        %1230 = vmatprep.subr.bf16.mxu0 0
        %1231 = vmatpush1.bf16.msra.mxu0 0
        %1232 = vmatprep.subr.bf16.mxu0 0
        %1233 = vmatpush1.bf16.msra.mxu0 0
        %1234 = vmatprep.subr.bf16.mxu0 0
        %1235 = vmatpush1.bf16.msra.mxu0 0
        %1236 = vmatprep.subr.bf16.mxu0 0
        %1237 = vmatpush1.bf16.msra.mxu0 0
        %1238 = vmatprep.subr.bf16.mxu0 0
        %1239 = vmatpush1.bf16.msra.mxu0 0
        %1240 = vmatprep.subr.bf16.mxu0 0
        %1241 = vmatpush1.bf16.msra.mxu0 0
        %1242 = vmatprep.subr.bf16.mxu0 0
        %1243 = vmatpush1.bf16.msra.mxu0 0
        %1244 = vmatprep.subr.bf16.mxu0 0
        %1245 = vmatpush1.bf16.msra.mxu0 0
        %1246 = vmatprep.subr.bf16.mxu0 0
        %1247 = vmatpush1.bf16.msra.mxu0 0
        %1248 = vmatprep.subr.bf16.mxu0 0
        %1249 = vmatpush1.bf16.msra.mxu0 0
        %1250 = vmatprep.subr.bf16.mxu0 0
        %1251 = vmatpush1.bf16.msra.mxu0 0
        %1252 = vmatprep.subr.bf16.mxu0 0
        %1253 = vmatpush1.bf16.msra.mxu0 0
        %1254 = vmatprep.subr.bf16.mxu0 0
        %1255 = vmatpush1.bf16.msra.mxu0 0
        %1256 = vmatprep.mubr.bf16.mxu0 0
        %1257 = vmatmul.mubr.bf16.gmra.mrb[0].mxu0 %v1222
        %v1258 = vpop.f32.mrb[0].mxu0
        %v1259 = vadd.f32 0.0, %v1258
        %v1260 = vpop.f32.mrb[0].mxu0
        %v1261 = vadd.f32 0.0, %v1260
        %v1262 = vpop.f32.mrb[0].mxu0
        %v1263 = vpop.f32.mrb[0].mxu0
        %1264 = vdwg.mxu0
        %v1265 = vadd.f32 %v1167, %v1259
        %v1266 = vadd.f32 %v1168, %v1261
        %1267 = vrot.lane.b32.xlu0 %v601, 112
        %v1268 = vpop.permute.xlu0 %1267
        %1269 = vrot.lane.b32.xlu0 %v603, 112
        %v1270 = vpop.permute.xlu0 %1269
        %1271 = vrot.lane.b32.xlu0 %v605, 112
        %v1272 = vpop.permute.xlu0 %1271
        %1273 = vrot.lane.b32.xlu0 %v607, 112
        %v1274 = vpop.permute.xlu0 %1273
        %1275 = vrot.lane.b32.xlu0 %v602, 112
        %v1276 = vpop.permute.xlu0 %1275
        %1277 = vrot.lane.b32.xlu0 %v604, 112
        %v1278 = vpop.permute.xlu0 %1277
        %1279 = vrot.lane.b32.xlu0 %v606, 112
        %v1280 = vpop.permute.xlu0 %1279
        %1281 = vrot.lane.b32.xlu0 %v608, 112
        %v1282 = vpop.permute.xlu0 %1281
        %vm1283 = vcmp.lt.s32.totalorder %v626, 112
        %v1284 = vsel %vm1283, %v1268, %v1276
        %v1285 = vsel %vm1283, %v1270, %v1278
        %v1286 = vsel %vm1283, %v1272, %v1280
        %v1287 = vsel %vm1283, %v1274, %v1282
        %v1288 = vsel %vm1283, %v1276, %v1268
        %v1289 = vsel %vm1283, %v1278, %v1270
        %v1290 = vsel %vm1283, %v1280, %v1272
        %v1291 = vsel %vm1283, %v1282, %v1274
        %s1292 = scalar_lea.vmem [#allocation14], 14
        %v1293 = vld [vmem:[%s1292] sm:$0x3]
        %v1295 = vlaneseq
        %v1296 = vshrl.u32 %v1295, 7
        %v1297 = vsub.s32 0, %v1296
        %v1298 = vrot.slane %v1293, %v1297
        %v1299 = vlaneseq
        %v1300 = vshrl.u32 %v1299, 7
        %v1301 = vsub.s32 1, %v1300
        %v1302 = vrot.slane %v1293, %v1301
        %v1305 = vmul.f32 %v1284, %v1298
        %v1306 = vmul.f32 %v1288, %v1302
        %v1307 = vmul.f32 %v1285, %v1298
        %v1308 = vmul.f32 %v1289, %v1302
        %v1309 = vmul.f32 %v1286, %v1298
        %v1310 = vmul.f32 %v1290, %v1302
        %v1311 = vmul.f32 %v1287, %v1298
        %v1312 = vmul.f32 %v1291, %v1302
        %v1313 = vpack.c.bf16 %v1307, %v1305
        %v1314 = vpack.c.bf16 %v1308, %v1306
        %v1315 = vpack.c.bf16 %v1311, %v1309
        %v1316 = vpack.c.bf16 %v1312, %v1310
        %s1317 = scalar_lea.vmem [#allocation13], 28
        %v1318 = vld [vmem:[%s1317] sm:$0xf]
        %v1320 = vsel %vm713, %v1318, 0
        %1322 = vmatprep.subr.bf16.mxu0 %v1314
        %1323 = vmatpush1.bf16.msra.mxu0 %v1313
        %1324 = vmatprep.subr.bf16.mxu0 %v1316
        %1325 = vmatpush1.bf16.msra.mxu0 %v1315
        %1326 = vmatprep.subr.bf16.mxu0 0
        %1327 = vmatpush1.bf16.msra.mxu0 0
        %1328 = vmatprep.subr.bf16.mxu0 0
        %1329 = vmatpush1.bf16.msra.mxu0 0
        %1330 = vmatprep.subr.bf16.mxu0 0
        %1331 = vmatpush1.bf16.msra.mxu0 0
        %1332 = vmatprep.subr.bf16.mxu0 0
        %1333 = vmatpush1.bf16.msra.mxu0 0
        %1334 = vmatprep.subr.bf16.mxu0 0
        %1335 = vmatpush1.bf16.msra.mxu0 0
        %1336 = vmatprep.subr.bf16.mxu0 0
        %1337 = vmatpush1.bf16.msra.mxu0 0
        %1338 = vmatprep.subr.bf16.mxu0 0
        %1339 = vmatpush1.bf16.msra.mxu0 0
        %1340 = vmatprep.subr.bf16.mxu0 0
        %1341 = vmatpush1.bf16.msra.mxu0 0
        %1342 = vmatprep.subr.bf16.mxu0 0
        %1343 = vmatpush1.bf16.msra.mxu0 0
        %1344 = vmatprep.subr.bf16.mxu0 0
        %1345 = vmatpush1.bf16.msra.mxu0 0
        %1346 = vmatprep.subr.bf16.mxu0 0
        %1347 = vmatpush1.bf16.msra.mxu0 0
        %1348 = vmatprep.subr.bf16.mxu0 0
        %1349 = vmatpush1.bf16.msra.mxu0 0
        %1350 = vmatprep.subr.bf16.mxu0 0
        %1351 = vmatpush1.bf16.msra.mxu0 0
        %1352 = vmatprep.subr.bf16.mxu0 0
        %1353 = vmatpush1.bf16.msra.mxu0 0
        %1354 = vmatprep.mubr.bf16.mxu0 0
        %1355 = vmatmul.mubr.bf16.gmra.mrb[0].mxu0 %v1320
        %v1356 = vpop.f32.mrb[0].mxu0
        %v1357 = vadd.f32 0.0, %v1356
        %v1358 = vpop.f32.mrb[0].mxu0
        %v1359 = vadd.f32 0.0, %v1358
        %v1360 = vpop.f32.mrb[0].mxu0
        %v1361 = vpop.f32.mrb[0].mxu0
        %1362 = vdwg.mxu0
        %v1363 = vadd.f32 %v1265, %v1357
        %v1364 = vadd.f32 %v1266, %v1359
        %1365 = vrot.lane.b32.xlu0 %v601, 111
        %v1366 = vpop.permute.xlu0 %1365
        %1367 = vrot.lane.b32.xlu0 %v603, 111
        %v1368 = vpop.permute.xlu0 %1367
        %1369 = vrot.lane.b32.xlu0 %v605, 111
        %v1370 = vpop.permute.xlu0 %1369
        %1371 = vrot.lane.b32.xlu0 %v607, 111
        %v1372 = vpop.permute.xlu0 %1371
        %1373 = vrot.lane.b32.xlu0 %v602, 111
        %v1374 = vpop.permute.xlu0 %1373
        %1375 = vrot.lane.b32.xlu0 %v604, 111
        %v1376 = vpop.permute.xlu0 %1375
        %1377 = vrot.lane.b32.xlu0 %v606, 111
        %v1378 = vpop.permute.xlu0 %1377
        %1379 = vrot.lane.b32.xlu0 %v608, 111
        %v1380 = vpop.permute.xlu0 %1379
        %vm1381 = vcmp.lt.s32.totalorder %v626, 111
        %v1382 = vsel %vm1381, %v1366, %v1374
        %v1383 = vsel %vm1381, %v1368, %v1376
        %v1384 = vsel %vm1381, %v1370, %v1378
        %v1385 = vsel %vm1381, %v1372, %v1380
        %v1386 = vsel %vm1381, %v1374, %v1366
        %v1387 = vsel %vm1381, %v1376, %v1368
        %v1388 = vsel %vm1381, %v1378, %v1370
        %v1389 = vsel %vm1381, %v1380, %v1372
        %s1390 = scalar_lea.vmem [#allocation14], 16
        %v1391 = vld [vmem:[%s1390] sm:$0x3]
        %v1393 = vlaneseq
        %v1394 = vshrl.u32 %v1393, 7
        %v1395 = vsub.s32 0, %v1394
        %v1396 = vrot.slane %v1391, %v1395
        %v1397 = vlaneseq
        %v1398 = vshrl.u32 %v1397, 7
        %v1399 = vsub.s32 1, %v1398
        %v1400 = vrot.slane %v1391, %v1399
        %v1403 = vmul.f32 %v1382, %v1396
        %v1404 = vmul.f32 %v1386, %v1400
        %v1405 = vmul.f32 %v1383, %v1396
        %v1406 = vmul.f32 %v1387, %v1400
        %v1407 = vmul.f32 %v1384, %v1396
        %v1408 = vmul.f32 %v1388, %v1400
        %v1409 = vmul.f32 %v1385, %v1396
        %v1410 = vmul.f32 %v1389, %v1400
        %v1411 = vpack.c.bf16 %v1405, %v1403
        %v1412 = vpack.c.bf16 %v1406, %v1404
        %v1413 = vpack.c.bf16 %v1409, %v1407
        %v1414 = vpack.c.bf16 %v1410, %v1408
        %s1415 = scalar_lea.vmem [#allocation13], 32
        %v1416 = vld [vmem:[%s1415] sm:$0xf]
        %v1418 = vsel %vm713, %v1416, 0
        %1420 = vmatprep.subr.bf16.mxu0 %v1412
        %1421 = vmatpush1.bf16.msra.mxu0 %v1411
        %1422 = vmatprep.subr.bf16.mxu0 %v1414
        %1423 = vmatpush1.bf16.msra.mxu0 %v1413
        %1424 = vmatprep.subr.bf16.mxu0 0
        %1425 = vmatpush1.bf16.msra.mxu0 0
        %1426 = vmatprep.subr.bf16.mxu0 0
        %1427 = vmatpush1.bf16.msra.mxu0 0
        %1428 = vmatprep.subr.bf16.mxu0 0
        %1429 = vmatpush1.bf16.msra.mxu0 0
        %1430 = vmatprep.subr.bf16.mxu0 0
        %1431 = vmatpush1.bf16.msra.mxu0 0
        %1432 = vmatprep.subr.bf16.mxu0 0
        %1433 = vmatpush1.bf16.msra.mxu0 0
        %1434 = vmatprep.subr.bf16.mxu0 0
        %1435 = vmatpush1.bf16.msra.mxu0 0
        %1436 = vmatprep.subr.bf16.mxu0 0
        %1437 = vmatpush1.bf16.msra.mxu0 0
        %1438 = vmatprep.subr.bf16.mxu0 0
        %1439 = vmatpush1.bf16.msra.mxu0 0
        %1440 = vmatprep.subr.bf16.mxu0 0
        %1441 = vmatpush1.bf16.msra.mxu0 0
        %1442 = vmatprep.subr.bf16.mxu0 0
        %1443 = vmatpush1.bf16.msra.mxu0 0
        %1444 = vmatprep.subr.bf16.mxu0 0
        %1445 = vmatpush1.bf16.msra.mxu0 0
        %1446 = vmatprep.subr.bf16.mxu0 0
        %1447 = vmatpush1.bf16.msra.mxu0 0
        %1448 = vmatprep.subr.bf16.mxu0 0
        %1449 = vmatpush1.bf16.msra.mxu0 0
        %1450 = vmatprep.subr.bf16.mxu0 0
        %1451 = vmatpush1.bf16.msra.mxu0 0
        %1452 = vmatprep.mubr.bf16.mxu0 0
        %1453 = vmatmul.mubr.bf16.gmra.mrb[0].mxu0 %v1418
        %v1454 = vpop.f32.mrb[0].mxu0
        %v1455 = vadd.f32 0.0, %v1454
        %v1456 = vpop.f32.mrb[0].mxu0
        %v1457 = vadd.f32 0.0, %v1456
        %v1458 = vpop.f32.mrb[0].mxu0
        %v1459 = vpop.f32.mrb[0].mxu0
        %1460 = vdwg.mxu0
        %v1461 = vadd.f32 %v1363, %v1455
        %v1462 = vadd.f32 %v1364, %v1457
        %v1464 = vcombine.high %v421, %v421
        %1466 = vst [vmem:[%s419] sm:$0xf] %v421
        %1467 = vst [vmem:[%s419 + $0x8] sm:$0xf] %v1464
        %v1470 = vrot.slane %v1461, 4
        %v1471 = vrot.slane %v1462, 4
        %1474 = vst [vmem:[%s419] sm:$0xf0] %v1470
        %1475 = vst [vmem:[%s419 + $0x8] sm:$0xf0] %v1471
        %1476 = vst [vmem:[%s419 + $0x10] sm:$0xf] %v1470
        %1477 = vst [vmem:[%s419 + $0x18] sm:$0xf] %v1471
        %s1478 = sand.u32 %s210, 1
        %s1479 = scalar_lea.sflag [#allocation4], %s1478
        %s1480 = sand.u32 %s210, 1
        %s1481 = smul.addr %s1480, 32
        %s1482 = scalar_lea.vmem [#allocation16], %s1481
        // Predicated region
        $region85: #{tpu_custom_call.1} parent=51 // pred_check
          %p1483 = pneg %p220
        $region86: #{tpu_custom_call.1} parent=51 // pred_check_branch
          %1485 = sbr.rel (%p1483) target = $region88
        $region87: #{tpu_custom_call.1} parent=51 // pred_region
          %s1487 = ssub.s32 512, 512
          %1488 = vsyncadd %s1479, %s1487
          %s1489 = smul.addr %s29, 4
          %s1490 = smul.addr %s1489, 128
          %s1491 = scalar_lea.hbm %s8, %s1490
          %s1492 = sshll.u32 %s1482, 4
          %s1493 = int_to_ptr.vmem [resolvable:$true] %s1492
          %1498 = dma.vmem_to_hbm [thread:$0]  %s1493, 512, %s1491, %s1479, 256, 256, 16
        $region88: #{tpu_custom_call.1} parent=51 // pred_fallthru
          _
      $region52: #{tpu_custom_call.1} parent=5 // pred_fallthru
        _
      %p1499 = scmp.le.s32.totalorder 2, %s24
      // Predicated region
      $region89: #{tpu_custom_call.1} parent=5 // pred_check
        %p1500 = pneg %p1499
      $region90: #{tpu_custom_call.1} parent=5 // pred_check_branch
        %1502 = sbr.rel (%p1500) target = $region92
      $region91: #{tpu_custom_call.1} parent=5 // pred_region
        %s1503 = ssub.s32 %s24, 2
        // Predicated region
        $region93: #{tpu_custom_call.1} parent=91 // pred_check
          %p1504 = pneg %p226
        $region94: #{tpu_custom_call.1} parent=91 // pred_check_branch
          %1506 = sbr.rel (%p1504) target = $region96
        $region95: #{tpu_custom_call.1} parent=91 // pred_region
          %s1507 = sand.u32 %s211, 1
          %s1508 = scalar_lea.sflag [#allocation4], %s1507
          %s1509 = sand.u32 %s211, 1
          %s1510 = smul.addr %s1509, 32
          %s1511 = scalar_lea.vmem [#allocation16], %s1510
          %1512 = dma.done %s1508, 512
        $region96: #{tpu_custom_call.1} parent=91 // pred_fallthru
          _
      $region92: #{tpu_custom_call.1} parent=5 // pred_fallthru
        _
    $region6: #{tpu_custom_call.1} parent=1 // loop_footer
      %s28 = sadd.s32 1, %s24
    $region7: #{tpu_custom_call.1} parent=1 // loop_footer_branch
      %23 = sbr.rel target = $region3
    $region8: #{tpu_custom_call.1} parent=1 // loop_exit
      _
    %1513 = vsyncpa [#allocation3], 1
    %s1514 = scalar_lea.sflag [#allocation3], 1
    %1515 = vsyncpa %s1514, 1
    %1516 = vsyncpa [#allocation6], 1
    %1517 = vsyncpa [#allocation9], 1
    %1518 = vsyncpa [#allocation12], 1
    %1519 = vsyncpa [#allocation15], 1
    %1520 = vsyncpa [#allocation4], 1
    %s1521 = scalar_lea.sflag [#allocation4], 1
    %1522 = vsyncpa %s1521, 1

</llo_original>
